<compile_context>
chip_gen: v7x
topology: tpu7x:2x2x1
jax: 0.10.0
libtpu: 0.0.40
codegen_flags: <defaults>
</compile_context>

<pallas_src>
import functools

import jax
import jax.numpy as jnp
from jax import lax
from jax.experimental import pallas as pl
from jax.experimental.pallas import tpu as pltpu


def flow_kernel(x_ref, w1_ref, b1_ref, w2_ref, b2_ref, o_ref, *,
                num_layers, d, cast_bf16):
    x = x_ref[...]                          # (TB, D) f32, lane-dense
    q = x[:, :d]                            # (TB, d)
    p = x[:, d:]                            # (TB, d)
    mx_dtype = jnp.bfloat16 if cast_bf16 else jnp.float32

    def mlp(i, src):
        # Conditioner: 2-layer tanh MLP.  Dots on the MXU with f32 accumulation;
        # bias add / tanh / residual stay in f32 (VPU/EUP).
        w1 = w1_ref[i].astype(mx_dtype)                 # (d, H)
        w2 = w2_ref[i].astype(mx_dtype)                 # (H, d)
        b1 = b1_ref[pl.ds(i, 1), :]                     # (1, H)
        b2 = b2_ref[pl.ds(i, 1), :]                     # (1, d)
        h = jnp.tanh(jnp.dot(src.astype(mx_dtype), w1,
                             preferred_element_type=jnp.float32) + b1)
        return jnp.dot(h.astype(mx_dtype), w2,
                       preferred_element_type=jnp.float32) + b2

    def pair_body(j, carry):
        q, p = carry
        i0 = 2 * j
        q = q + mlp(i0, p)        # even layer: update_q
        p = p + mlp(i0 + 1, q)    # odd  layer: update_p
        return q, p

    n_pairs = num_layers // 2
    q, p = lax.fori_loop(0, n_pairs, pair_body, (q, p),
                         unroll=(n_pairs <= 8))

    if num_layers % 2 == 1:       # trailing unpaired update_q layer
        q = q + mlp(num_layers - 1, p)

    o_ref[...] = jnp.concatenate([q, p], axis=-1).astype(o_ref.dtype)


def _pick_block_rows(B, max_rows=512):
    """Largest batch-tile (multiple of 8, <= max_rows) that divides B."""
    for tb in (512, 256, 128, 64, 32, 16, 8):
        if tb <= max_rows and tb <= B and B % tb == 0:
            return tb
    return B


def flow_forward(x, w1, b1, w2, b2, *, block_b=None, cast_bf16=False):
    """x: (B, D) f32.  w1:(L,d,H)  b1:(L,H)  w2:(L,H,d)  b2:(L,d)."""
    B, D = x.shape
    d = D // 2
    L, _, H = w1.shape
    if block_b is None:
        block_b = _pick_block_rows(B)
    assert B % block_b == 0

    kernel = functools.partial(flow_kernel, num_layers=L, d=d,
                               cast_bf16=cast_bf16)
    return pl.pallas_call(
        kernel,
        out_shape=jax.ShapeDtypeStruct((B, D), x.dtype),
        grid=(B // block_b,),
        in_specs=[
            pl.BlockSpec((block_b, D), lambda b: (b, 0)),      # state tile
            pl.BlockSpec((L, d, H), lambda b: (0, 0, 0)),      # weights stay
            pl.BlockSpec((L, H), lambda b: (0, 0)),            # VMEM-resident
            pl.BlockSpec((L, H, d), lambda b: (0, 0, 0)),
            pl.BlockSpec((L, d), lambda b: (0, 0)),
        ],
        out_specs=pl.BlockSpec((block_b, D), lambda b: (b, 0)),
        input_output_aliases={0: 0},                           # in-place update
        compiler_params=pltpu.CompilerParams(
            dimension_semantics=("parallel",)),                # megacore on v7x
    )(x, w1, b1, w2, b2)


def flow_reference(x, w1, b1, w2, b2):
    """Pure-JAX reference mirroring the PyTorch Flow.forward semantics."""
    d = x.shape[1] // 2
    q, p = x[:, :d], x[:, d:]
    for i in range(w1.shape[0]):
        src = p if i % 2 == 0 else q
        h = jnp.tanh(src @ w1[i] + b1[i])
        shift = h @ w2[i] + b2[i]
        if i % 2 == 0:
            q = q + shift
        else:
            p = p + shift
    return jnp.concatenate([q, p], axis=-1)


if __name__ == "__main__":
    # Shapes consistent with Flow(input_dim, num_layers, ...); batch is large
    # enough to exercise batch tiling (2 grid steps of 128 rows).
    batch = 256
    input_dim = 32          # q, p each of dim 16
    num_layers = 4          # alternates update_q / update_p
    hidden = 32             # conditioner MLP hidden width
    d = input_dim // 2

    key = jax.random.PRNGKey(0)
    kx, k1, k2, k3, k4 = jax.random.split(key, 5)

    x = jax.random.normal(kx, (batch, input_dim), dtype=jnp.float32)
    # Deterministic synthetic parameters (not a checkpoint load).
    w1 = 0.3 * jax.random.normal(k1, (num_layers, d, hidden), dtype=jnp.float32)
    b1 = 0.1 * jax.random.normal(k2, (num_layers, hidden), dtype=jnp.float32)
    w2 = 0.3 * jax.random.normal(k3, (num_layers, hidden, d), dtype=jnp.float32)
    b2 = 0.1 * jax.random.normal(k4, (num_layers, d), dtype=jnp.float32)

    ref = flow_reference(x, w1, b1, w2, b2)

    # Full-f32 path: exact parity with the reference.
    out = jax.block_until_ready(flow_forward(x, w1, b1, w2, b2))
    assert out.shape == (batch, input_dim)
    assert jnp.allclose(out, ref, atol=1e-5, rtol=1e-5)

    # bf16 MXU-operand path (v6e/v7x win; f32 accumulation & elementwise).
    out_bf16 = jax.block_until_ready(
        flow_forward(x, w1, b1, w2, b2, cast_bf16=True))
    assert jnp.allclose(out_bf16, ref, atol=1e-1, rtol=1e-1)

    # TODO(synk): Flow.inverse (reverse layer order) is not implemented; only
    # the forward pass is required here.
    print("KERNEL_OK")
</pallas_src>

<mosaic_0001>
module attributes {stable_mosaic.version = 11 : i64} {
  func.func @flow_kernel(%arg0: i32, %arg1: memref<256x32xf32, #tpu.memory_space<vmem>>, %arg2: memref<4x16x32xf32, #tpu.memory_space<vmem>>, %arg3: memref<4x32xf32, #tpu.memory_space<vmem>>, %arg4: memref<4x32x16xf32, #tpu.memory_space<vmem>>, %arg5: memref<4x16xf32, #tpu.memory_space<vmem>>, %arg6: memref<256x32xf32, #tpu.memory_space<vmem>>) attributes {dimension_semantics = [#tpu.dimension_semantics<parallel>], iteration_bounds = array<i64: 1>, scalar_prefetch = 0 : i64, scratch_operands = 0 : i64, tpu.core_type = #tpu.core_type<tc>, window_params = [{transform_indices = @transform_0, window_bounds = array<i64: 256, 32>}, {pipeline_mode = #tpu.pipeline_mode<synchronous>, transform_indices = @transform_1, window_bounds = array<i64: 4, 16, 32>}, {pipeline_mode = #tpu.pipeline_mode<synchronous>, transform_indices = @transform_2, window_bounds = array<i64: 4, 32>}, {pipeline_mode = #tpu.pipeline_mode<synchronous>, transform_indices = @transform_3, window_bounds = array<i64: 4, 32, 16>}, {pipeline_mode = #tpu.pipeline_mode<synchronous>, transform_indices = @transform_4, window_bounds = array<i64: 4, 16>}, {transform_indices = @transform_5, window_bounds = array<i64: 256, 32>}]} {
    %c0 = arith.constant 0 : index
    %c0_0 = arith.constant 0 : index
    %0 = vector.load %arg1[%c0, %c0_0] : memref<256x32xf32, #tpu.memory_space<vmem>>, vector<256x32xf32>
    %1 = vector.extract_strided_slice %0 {offsets = [0, 0], sizes = [256, 16], strides = [1, 1]} : vector<256x32xf32> to vector<256x16xf32>
    %2 = vector.extract_strided_slice %0 {offsets = [0, 16], sizes = [256, 16], strides = [1, 1]} : vector<256x32xf32> to vector<256x16xf32>
    %c0_i32 = arith.constant 0 : i32
    %c2_i32 = arith.constant 2 : i32
    %3 = arith.muli %c2_i32, %c0_i32 : i32
    %4 = arith.index_cast %3 : i32 to index
    %c0_1 = arith.constant 0 : index
    %c0_2 = arith.constant 0 : index
    %5 = vector.load %arg2[%4, %c0_1, %c0_2] : memref<4x16x32xf32, #tpu.memory_space<vmem>>, vector<1x16x32xf32>
    %6 = vector.shape_cast %5 : vector<1x16x32xf32> to vector<16x32xf32>
    %7 = arith.index_cast %3 : i32 to index
    %c0_3 = arith.constant 0 : index
    %c0_4 = arith.constant 0 : index
    %8 = vector.load %arg4[%7, %c0_3, %c0_4] : memref<4x32x16xf32, #tpu.memory_space<vmem>>, vector<1x32x16xf32>
    %9 = vector.shape_cast %8 : vector<1x32x16xf32> to vector<32x16xf32>
    %10 = arith.index_cast %3 : i32 to index
    %c0_5 = arith.constant 0 : index
    %11 = vector.load %arg3[%10, %c0_5] : memref<4x32xf32, #tpu.memory_space<vmem>>, vector<1x32xf32>
    %12 = arith.index_cast %3 : i32 to index
    %c0_6 = arith.constant 0 : index
    %13 = vector.load %arg5[%12, %c0_6] : memref<4x16xf32, #tpu.memory_space<vmem>>, vector<1x16xf32>
    %cst = arith.constant dense<0.000000e+00> : vector<256x32xf32>
    %14 = tpu.matmul %2, %6, %cst {dimension_numbers = #tpu.dot_dimension_numbers<[1], [0], [0], [1], [0, 0, 1, 1], [], []>} : vector<256x16xf32>, vector<16x32xf32>, vector<256x32xf32> -> vector<256x32xf32>
    %15 = vector.broadcast %11 : vector<1x32xf32> to vector<256x32xf32>
    %16 = arith.addf %14, %15 : vector<256x32xf32>
    %17 = math.tanh %16 : vector<256x32xf32>
    %cst_7 = arith.constant dense<0.000000e+00> : vector<256x16xf32>
    %18 = tpu.matmul %17, %9, %cst_7 {dimension_numbers = #tpu.dot_dimension_numbers<[1], [0], [0], [1], [0, 0, 1, 1], [], []>} : vector<256x32xf32>, vector<32x16xf32>, vector<256x16xf32> -> vector<256x16xf32>
    %19 = vector.broadcast %13 : vector<1x16xf32> to vector<256x16xf32>
    %20 = arith.addf %18, %19 : vector<256x16xf32>
    %21 = arith.addf %1, %20 : vector<256x16xf32>
    %c1_i32 = arith.constant 1 : i32
    %22 = arith.addi %3, %c1_i32 : i32
    %23 = arith.index_cast %22 : i32 to index
    %c0_8 = arith.constant 0 : index
    %c0_9 = arith.constant 0 : index
    %24 = vector.load %arg2[%23, %c0_8, %c0_9] : memref<4x16x32xf32, #tpu.memory_space<vmem>>, vector<1x16x32xf32>
    %25 = vector.shape_cast %24 : vector<1x16x32xf32> to vector<16x32xf32>
    %26 = arith.index_cast %22 : i32 to index
    %c0_10 = arith.constant 0 : index
    %c0_11 = arith.constant 0 : index
    %27 = vector.load %arg4[%26, %c0_10, %c0_11] : memref<4x32x16xf32, #tpu.memory_space<vmem>>, vector<1x32x16xf32>
    %28 = vector.shape_cast %27 : vector<1x32x16xf32> to vector<32x16xf32>
    %29 = arith.index_cast %22 : i32 to index
    %c0_12 = arith.constant 0 : index
    %30 = vector.load %arg3[%29, %c0_12] : memref<4x32xf32, #tpu.memory_space<vmem>>, vector<1x32xf32>
    %31 = arith.index_cast %22 : i32 to index
    %c0_13 = arith.constant 0 : index
    %32 = vector.load %arg5[%31, %c0_13] : memref<4x16xf32, #tpu.memory_space<vmem>>, vector<1x16xf32>
    %cst_14 = arith.constant dense<0.000000e+00> : vector<256x32xf32>
    %33 = tpu.matmul %21, %25, %cst_14 {dimension_numbers = #tpu.dot_dimension_numbers<[1], [0], [0], [1], [0, 0, 1, 1], [], []>} : vector<256x16xf32>, vector<16x32xf32>, vector<256x32xf32> -> vector<256x32xf32>
    %34 = vector.broadcast %30 : vector<1x32xf32> to vector<256x32xf32>
    %35 = arith.addf %33, %34 : vector<256x32xf32>
    %36 = math.tanh %35 : vector<256x32xf32>
    %cst_15 = arith.constant dense<0.000000e+00> : vector<256x16xf32>
    %37 = tpu.matmul %36, %28, %cst_15 {dimension_numbers = #tpu.dot_dimension_numbers<[1], [0], [0], [1], [0, 0, 1, 1], [], []>} : vector<256x32xf32>, vector<32x16xf32>, vector<256x16xf32> -> vector<256x16xf32>
    %38 = vector.broadcast %32 : vector<1x16xf32> to vector<256x16xf32>
    %39 = arith.addf %37, %38 : vector<256x16xf32>
    %40 = arith.addf %2, %39 : vector<256x16xf32>
    %c1_i32_16 = arith.constant 1 : i32
    %c2_i32_17 = arith.constant 2 : i32
    %41 = arith.muli %c2_i32_17, %c1_i32_16 : i32
    %42 = arith.index_cast %41 : i32 to index
    %c0_18 = arith.constant 0 : index
    %c0_19 = arith.constant 0 : index
    %43 = vector.load %arg2[%42, %c0_18, %c0_19] : memref<4x16x32xf32, #tpu.memory_space<vmem>>, vector<1x16x32xf32>
    %44 = vector.shape_cast %43 : vector<1x16x32xf32> to vector<16x32xf32>
    %45 = arith.index_cast %41 : i32 to index
    %c0_20 = arith.constant 0 : index
    %c0_21 = arith.constant 0 : index
    %46 = vector.load %arg4[%45, %c0_20, %c0_21] : memref<4x32x16xf32, #tpu.memory_space<vmem>>, vector<1x32x16xf32>
    %47 = vector.shape_cast %46 : vector<1x32x16xf32> to vector<32x16xf32>
    %48 = arith.index_cast %41 : i32 to index
    %c0_22 = arith.constant 0 : index
    %49 = vector.load %arg3[%48, %c0_22] : memref<4x32xf32, #tpu.memory_space<vmem>>, vector<1x32xf32>
    %50 = arith.index_cast %41 : i32 to index
    %c0_23 = arith.constant 0 : index
    %51 = vector.load %arg5[%50, %c0_23] : memref<4x16xf32, #tpu.memory_space<vmem>>, vector<1x16xf32>
    %cst_24 = arith.constant dense<0.000000e+00> : vector<256x32xf32>
    %52 = tpu.matmul %40, %44, %cst_24 {dimension_numbers = #tpu.dot_dimension_numbers<[1], [0], [0], [1], [0, 0, 1, 1], [], []>} : vector<256x16xf32>, vector<16x32xf32>, vector<256x32xf32> -> vector<256x32xf32>
    %53 = vector.broadcast %49 : vector<1x32xf32> to vector<256x32xf32>
    %54 = arith.addf %52, %53 : vector<256x32xf32>
    %55 = math.tanh %54 : vector<256x32xf32>
    %cst_25 = arith.constant dense<0.000000e+00> : vector<256x16xf32>
    %56 = tpu.matmul %55, %47, %cst_25 {dimension_numbers = #tpu.dot_dimension_numbers<[1], [0], [0], [1], [0, 0, 1, 1], [], []>} : vector<256x32xf32>, vector<32x16xf32>, vector<256x16xf32> -> vector<256x16xf32>
    %57 = vector.broadcast %51 : vector<1x16xf32> to vector<256x16xf32>
    %58 = arith.addf %56, %57 : vector<256x16xf32>
    %59 = arith.addf %21, %58 : vector<256x16xf32>
    %c1_i32_26 = arith.constant 1 : i32
    %60 = arith.addi %41, %c1_i32_26 : i32
    %61 = arith.index_cast %60 : i32 to index
    %c0_27 = arith.constant 0 : index
    %c0_28 = arith.constant 0 : index
    %62 = vector.load %arg2[%61, %c0_27, %c0_28] : memref<4x16x32xf32, #tpu.memory_space<vmem>>, vector<1x16x32xf32>
    %63 = vector.shape_cast %62 : vector<1x16x32xf32> to vector<16x32xf32>
    %64 = arith.index_cast %60 : i32 to index
    %c0_29 = arith.constant 0 : index
    %c0_30 = arith.constant 0 : index
    %65 = vector.load %arg4[%64, %c0_29, %c0_30] : memref<4x32x16xf32, #tpu.memory_space<vmem>>, vector<1x32x16xf32>
    %66 = vector.shape_cast %65 : vector<1x32x16xf32> to vector<32x16xf32>
    %67 = arith.index_cast %60 : i32 to index
    %c0_31 = arith.constant 0 : index
    %68 = vector.load %arg3[%67, %c0_31] : memref<4x32xf32, #tpu.memory_space<vmem>>, vector<1x32xf32>
    %69 = arith.index_cast %60 : i32 to index
    %c0_32 = arith.constant 0 : index
    %70 = vector.load %arg5[%69, %c0_32] : memref<4x16xf32, #tpu.memory_space<vmem>>, vector<1x16xf32>
    %cst_33 = arith.constant dense<0.000000e+00> : vector<256x32xf32>
    %71 = tpu.matmul %59, %63, %cst_33 {dimension_numbers = #tpu.dot_dimension_numbers<[1], [0], [0], [1], [0, 0, 1, 1], [], []>} : vector<256x16xf32>, vector<16x32xf32>, vector<256x32xf32> -> vector<256x32xf32>
    %72 = vector.broadcast %68 : vector<1x32xf32> to vector<256x32xf32>
    %73 = arith.addf %71, %72 : vector<256x32xf32>
    %74 = math.tanh %73 : vector<256x32xf32>
    %cst_34 = arith.constant dense<0.000000e+00> : vector<256x16xf32>
    %75 = tpu.matmul %74, %66, %cst_34 {dimension_numbers = #tpu.dot_dimension_numbers<[1], [0], [0], [1], [0, 0, 1, 1], [], []>} : vector<256x32xf32>, vector<32x16xf32>, vector<256x16xf32> -> vector<256x16xf32>
    %76 = vector.broadcast %70 : vector<1x16xf32> to vector<256x16xf32>
    %77 = arith.addf %75, %76 : vector<256x16xf32>
    %78 = arith.addf %40, %77 : vector<256x16xf32>
    %c2_i32_35 = arith.constant 2 : i32
    %79 = tpu.concatenate %59, %78 in 1 : vector<256x16xf32>, vector<256x16xf32> -> vector<256x32xf32>
    %c0_36 = arith.constant 0 : index
    %c0_37 = arith.constant 0 : index
    %80 = vector.load %arg6[%c0_36, %c0_37] : memref<256x32xf32, #tpu.memory_space<vmem>>, vector<256x32xf32>
    tpu.vector_store %arg6[%c0_36, %c0_37], %79 {strides = array<i32>} : memref<256x32xf32, #tpu.memory_space<vmem>>, vector<256x32xf32>,
    return
  }
  func.func @transform_0(%arg0: i32) -> (i32, i32) {
    %c0_i32 = arith.constant 0 : i32
    %c0_i32_0 = arith.constant 0 : i32
    return %arg0, %c0_i32 : i32, i32
  }
  func.func @transform_1(%arg0: i32) -> (i32, i32, i32) {
    %c0_i32 = arith.constant 0 : i32
    %c0_i32_0 = arith.constant 0 : i32
    %c0_i32_1 = arith.constant 0 : i32
    %c0_i32_2 = arith.constant 0 : i32
    return %c0_i32, %c0_i32_0, %c0_i32_1 : i32, i32, i32
  }
  func.func @transform_2(%arg0: i32) -> (i32, i32) {
    %c0_i32 = arith.constant 0 : i32
    %c0_i32_0 = arith.constant 0 : i32
    %c0_i32_1 = arith.constant 0 : i32
    return %c0_i32, %c0_i32_0 : i32, i32
  }
  func.func @transform_3(%arg0: i32) -> (i32, i32, i32) {
    %c0_i32 = arith.constant 0 : i32
    %c0_i32_0 = arith.constant 0 : i32
    %c0_i32_1 = arith.constant 0 : i32
    %c0_i32_2 = arith.constant 0 : i32
    return %c0_i32, %c0_i32_0, %c0_i32_1 : i32, i32, i32
  }
  func.func @transform_4(%arg0: i32) -> (i32, i32) {
    %c0_i32 = arith.constant 0 : i32
    %c0_i32_0 = arith.constant 0 : i32
    %c0_i32_1 = arith.constant 0 : i32
    return %c0_i32, %c0_i32_0 : i32, i32
  }
  func.func @transform_5(%arg0: i32) -> (i32, i32) {
    %c0_i32 = arith.constant 0 : i32
    %c0_i32_0 = arith.constant 0 : i32
    return %arg0, %c0_i32 : i32, i32
  }
}

</mosaic_0001>

<llo_original>
// kernel: tpu_custom_call.1
$region0: #{tpu_custom_call.1}
  #allocation0 [shape = 'u32[]', space=smem, size = 0x4, offset = 0x4, fixed_abs, tag = 'smem constant byte address 0x4 - core index']
  #allocation1 [shape = 'u32[144,128]{1,0:T(1,128)}', space=vmem, size = 0x12000, scoped, tag = 'internal scratch']
  %s0 = inlined_call_operand.vmem [shape: f32[256,32], index: 0, kind: input, shape index: {}, may-alias: {0,5}]
  %s1 = inlined_call_operand.vmem [shape: f32[4,16,32], index: 1, kind: input, shape index: {}]
  %s2 = inlined_call_operand.vmem [shape: f32[4,32], index: 2, kind: input, shape index: {}]
  %s3 = inlined_call_operand.vmem [shape: f32[4,32,16], index: 3, kind: input, shape index: {}]
  %s4 = inlined_call_operand.vmem [shape: f32[4,16], index: 4, kind: input, shape index: {}]
  %s5 = inlined_call_operand.vmem [shape: f32[256,32], index: 5, kind: output, shape index: {}, may-alias: {0,5}]
  %s6 = sld [smem:[#allocation0]]
  $region30: #{tpu_custom_call.1} parent=0
    _
  %s8 = ssub.s32 1, %s6
  %s9 = scalar_select 0, %s8, %s6
  // Predicated region
  $region2: #{tpu_custom_call.1} parent=0 // pred_check
    _
  $region3: #{tpu_custom_call.1} parent=0 // pred_check_branch
    %11 = sbr.rel (0) target = $region5
  $region4: #{tpu_custom_call.1} parent=0 // pred_region
    _
  $region5: #{tpu_custom_call.1} parent=0 // pred_fallthru
    _
  // Predicated region
  $region6: #{tpu_custom_call.1} parent=0 // pred_check
    _
  $region7: #{tpu_custom_call.1} parent=0 // pred_check_branch
    %13 = sbr.rel (0) target = $region9
  $region8: #{tpu_custom_call.1} parent=0 // pred_region
    _
  $region9: #{tpu_custom_call.1} parent=0 // pred_fallthru
    _
  // Predicated region
  $region10: #{tpu_custom_call.1} parent=0 // pred_check
    _
  $region11: #{tpu_custom_call.1} parent=0 // pred_check_branch
    %15 = sbr.rel (0) target = $region13
  $region12: #{tpu_custom_call.1} parent=0 // pred_region
    _
  $region13: #{tpu_custom_call.1} parent=0 // pred_fallthru
    _
  // Predicated region
  $region14: #{tpu_custom_call.1} parent=0 // pred_check
    _
  $region15: #{tpu_custom_call.1} parent=0 // pred_check_branch
    %17 = sbr.rel (0) target = $region17
  $region16: #{tpu_custom_call.1} parent=0 // pred_region
    _
  $region17: #{tpu_custom_call.1} parent=0 // pred_fallthru
    _
  // Predicated region
  $region18: #{tpu_custom_call.1} parent=0 // pred_check
    _
  $region19: #{tpu_custom_call.1} parent=0 // pred_check_branch
    %19 = sbr.rel (0) target = $region21
  $region20: #{tpu_custom_call.1} parent=0 // pred_region
    _
  $region21: #{tpu_custom_call.1} parent=0 // pred_fallthru
    _
  %v20 = vld [vmem:[%s0] sm:$0xff]
  %v21 = vld [vmem:[%s0 + $0x8] sm:$0xff]
  %v22 = vld [vmem:[%s0 + $0x10] sm:$0xff]
  %v23 = vld [vmem:[%s0 + $0x18] sm:$0xff]
  %v24 = vld [vmem:[%s0 + $0x20] sm:$0xff]
  %v25 = vld [vmem:[%s0 + $0x28] sm:$0xff]
  %v26 = vld [vmem:[%s0 + $0x30] sm:$0xff]
  %v27 = vld [vmem:[%s0 + $0x38] sm:$0xff]
  %v28 = vld [vmem:[%s0 + $0x40] sm:$0xff]
  %v29 = vld [vmem:[%s0 + $0x48] sm:$0xff]
  %v30 = vld [vmem:[%s0 + $0x50] sm:$0xff]
  %v31 = vld [vmem:[%s0 + $0x58] sm:$0xff]
  %v32 = vld [vmem:[%s0 + $0x60] sm:$0xff]
  %v33 = vld [vmem:[%s0 + $0x68] sm:$0xff]
  %v34 = vld [vmem:[%s0 + $0x70] sm:$0xff]
  %v35 = vld [vmem:[%s0 + $0x78] sm:$0xff]
  %v36 = vld [vmem:[%s0 + $0x80] sm:$0xff]
  %v37 = vld [vmem:[%s0 + $0x88] sm:$0xff]
  %v38 = vld [vmem:[%s0 + $0x90] sm:$0xff]
  %v39 = vld [vmem:[%s0 + $0x98] sm:$0xff]
  %v40 = vld [vmem:[%s0 + $0xa0] sm:$0xff]
  %v41 = vld [vmem:[%s0 + $0xa8] sm:$0xff]
  %v42 = vld [vmem:[%s0 + $0xb0] sm:$0xff]
  %v43 = vld [vmem:[%s0 + $0xb8] sm:$0xff]
  %v44 = vld [vmem:[%s0 + $0xc0] sm:$0xff]
  %v45 = vld [vmem:[%s0 + $0xc8] sm:$0xff]
  %v46 = vld [vmem:[%s0 + $0xd0] sm:$0xff]
  %v47 = vld [vmem:[%s0 + $0xd8] sm:$0xff]
  %v48 = vld [vmem:[%s0 + $0xe0] sm:$0xff]
  %v49 = vld [vmem:[%s0 + $0xe8] sm:$0xff]
  %v50 = vld [vmem:[%s0 + $0xf0] sm:$0xff]
  %v51 = vld [vmem:[%s0 + $0xf8] sm:$0xff]
  %v52 = vld [vmem:[%s1] sm:$0xff]
  %v53 = vld [vmem:[%s1 + $0x8] sm:$0xff]
  %v54 = vld [vmem:[%s3] sm:$0xff]
  %v55 = vld [vmem:[%s3 + $0x8] sm:$0xff]
  %v56 = vld [vmem:[%s3 + $0x10] sm:$0xff]
  %v57 = vld [vmem:[%s3 + $0x18] sm:$0xff]
  %v58 = vld [vmem:[%s2] sm:$0x1]
  %v59 = vld [vmem:[%s4] sm:$0x1]
  %v60 = vlaneseq
  %v61 = vshrl.u32 %v60, 7
  %v62 = vsub.s32 0, %v61
  %v63 = vrot.slane %v58, %v62
  %96 = vrot.lane.b32.xlu0 %v20, 112
  %v97 = vpop.permute.xlu0 %96
  %98 = vrot.lane.b32.xlu0 %v21, 112
  %v99 = vpop.permute.xlu0 %98
  %100 = vrot.lane.b32.xlu0 %v22, 112
  %v101 = vpop.permute.xlu0 %100
  %102 = vrot.lane.b32.xlu0 %v23, 112
  %v103 = vpop.permute.xlu0 %102
  %104 = vrot.lane.b32.xlu0 %v24, 112
  %v105 = vpop.permute.xlu0 %104
  %106 = vrot.lane.b32.xlu0 %v25, 112
  %v107 = vpop.permute.xlu0 %106
  %108 = vrot.lane.b32.xlu0 %v26, 112
  %v109 = vpop.permute.xlu0 %108
  %110 = vrot.lane.b32.xlu0 %v27, 112
  %v111 = vpop.permute.xlu0 %110
  %112 = vrot.lane.b32.xlu0 %v28, 112
  %v113 = vpop.permute.xlu0 %112
  %114 = vrot.lane.b32.xlu0 %v29, 112
  %v115 = vpop.permute.xlu0 %114
  %116 = vrot.lane.b32.xlu0 %v30, 112
  %v117 = vpop.permute.xlu0 %116
  %118 = vrot.lane.b32.xlu0 %v31, 112
  %v119 = vpop.permute.xlu0 %118
  %120 = vrot.lane.b32.xlu0 %v32, 112
  %v121 = vpop.permute.xlu0 %120
  %122 = vrot.lane.b32.xlu0 %v33, 112
  %v123 = vpop.permute.xlu0 %122
  %124 = vrot.lane.b32.xlu0 %v34, 112
  %v125 = vpop.permute.xlu0 %124
  %126 = vrot.lane.b32.xlu0 %v35, 112
  %v127 = vpop.permute.xlu0 %126
  %128 = vrot.lane.b32.xlu0 %v36, 112
  %v129 = vpop.permute.xlu0 %128
  %130 = vrot.lane.b32.xlu0 %v37, 112
  %v131 = vpop.permute.xlu0 %130
  %132 = vrot.lane.b32.xlu0 %v38, 112
  %v133 = vpop.permute.xlu0 %132
  %134 = vrot.lane.b32.xlu0 %v39, 112
  %v135 = vpop.permute.xlu0 %134
  %136 = vrot.lane.b32.xlu0 %v40, 112
  %v137 = vpop.permute.xlu0 %136
  %138 = vrot.lane.b32.xlu0 %v41, 112
  %v139 = vpop.permute.xlu0 %138
  %140 = vrot.lane.b32.xlu0 %v42, 112
  %v141 = vpop.permute.xlu0 %140
  %142 = vrot.lane.b32.xlu0 %v43, 112
  %v143 = vpop.permute.xlu0 %142
  %144 = vrot.lane.b32.xlu0 %v44, 112
  %v145 = vpop.permute.xlu0 %144
  %146 = vrot.lane.b32.xlu0 %v45, 112
  %v147 = vpop.permute.xlu0 %146
  %148 = vrot.lane.b32.xlu0 %v46, 112
  %v149 = vpop.permute.xlu0 %148
  %150 = vrot.lane.b32.xlu0 %v47, 112
  %v151 = vpop.permute.xlu0 %150
  %152 = vrot.lane.b32.xlu0 %v48, 112
  %v153 = vpop.permute.xlu0 %152
  %154 = vrot.lane.b32.xlu0 %v49, 112
  %v155 = vpop.permute.xlu0 %154
  %156 = vrot.lane.b32.xlu0 %v50, 112
  %v157 = vpop.permute.xlu0 %156
  %158 = vrot.lane.b32.xlu0 %v51, 112
  %v159 = vpop.permute.xlu0 %158
  %vm160 = vcmask 130048
  %v161 = vsel %vm160, %v97, 0
  %v163 = vsel %vm160, %v99, 0
  %v165 = vsel %vm160, %v101, 0
  %v167 = vsel %vm160, %v103, 0
  %v169 = vsel %vm160, %v105, 0
  %v171 = vsel %vm160, %v107, 0
  %v173 = vsel %vm160, %v109, 0
  %v175 = vsel %vm160, %v111, 0
  %v177 = vsel %vm160, %v113, 0
  %v179 = vsel %vm160, %v115, 0
  %v181 = vsel %vm160, %v117, 0
  %v183 = vsel %vm160, %v119, 0
  %v185 = vsel %vm160, %v121, 0
  %v187 = vsel %vm160, %v123, 0
  %v189 = vsel %vm160, %v125, 0
  %v191 = vsel %vm160, %v127, 0
  %v193 = vsel %vm160, %v129, 0
  %v195 = vsel %vm160, %v131, 0
  %v197 = vsel %vm160, %v133, 0
  %v199 = vsel %vm160, %v135, 0
  %v201 = vsel %vm160, %v137, 0
  %v203 = vsel %vm160, %v139, 0
  %v205 = vsel %vm160, %v141, 0
  %v207 = vsel %vm160, %v143, 0
  %v209 = vsel %vm160, %v145, 0
  %v211 = vsel %vm160, %v147, 0
  %v213 = vsel %vm160, %v149, 0
  %v215 = vsel %vm160, %v151, 0
  %v217 = vsel %vm160, %v153, 0
  %v219 = vsel %vm160, %v155, 0
  %v221 = vsel %vm160, %v157, 0
  %v223 = vsel %vm160, %v159, 0
  %225 = vmatprep.subr.mxu0 0.0
  %226 = vmatpush1.msra.mxu0 %v52
  %227 = vmatprep.subr.mxu0 0.0
  %228 = vmatpush1.msra.mxu0 %v53
  %229 = vmatprep.subr.mxu0 0.0
  %230 = vmatpush1.msra.mxu0 0.0
  %231 = vmatprep.subr.mxu0 0.0
  %232 = vmatpush1.msra.mxu0 0.0
  %233 = vmatprep.subr.mxu0 0.0
  %234 = vmatpush1.msra.mxu0 0.0
  %235 = vmatprep.subr.mxu0 0.0
  %236 = vmatpush1.msra.mxu0 0.0
  %237 = vmatprep.subr.mxu0 0.0
  %238 = vmatpush1.msra.mxu0 0.0
  %239 = vmatprep.subr.mxu0 0.0
  %240 = vmatpush1.msra.mxu0 0.0
  %241 = vmatprep.subr.mxu0 0.0
  %242 = vmatpush1.msra.mxu0 0.0
  %243 = vmatprep.subr.mxu0 0.0
  %244 = vmatpush1.msra.mxu0 0.0
  %245 = vmatprep.subr.mxu0 0.0
  %246 = vmatpush1.msra.mxu0 0.0
  %247 = vmatprep.subr.mxu0 0.0
  %248 = vmatpush1.msra.mxu0 0.0
  %249 = vmatprep.subr.mxu0 0.0
  %250 = vmatpush1.msra.mxu0 0.0
  %251 = vmatprep.subr.mxu0 0.0
  %252 = vmatpush1.msra.mxu0 0.0
  %253 = vmatprep.subr.mxu0 0.0
  %254 = vmatpush1.msra.mxu0 0.0
  %255 = vmatprep.subr.mxu0 0.0
  %256 = vmatpush1.msra.mxu0 0.0
  %257 = vmatprep.subr.mxu0 0.0
  %258 = vmatpush1.msra.mxu0 0.0
  %259 = vmatprep.subr.mxu0 0.0
  %260 = vmatpush1.msra.mxu0 0.0
  %261 = vmatprep.subr.mxu0 0.0
  %262 = vmatpush1.msra.mxu0 0.0
  %263 = vmatprep.subr.mxu0 0.0
  %264 = vmatpush1.msra.mxu0 0.0
  %265 = vmatprep.subr.mxu0 0.0
  %266 = vmatpush1.msra.mxu0 0.0
  %267 = vmatprep.subr.mxu0 0.0
  %268 = vmatpush1.msra.mxu0 0.0
  %269 = vmatprep.subr.mxu0 0.0
  %270 = vmatpush1.msra.mxu0 0.0
  %271 = vmatprep.subr.mxu0 0.0
  %272 = vmatpush1.msra.mxu0 0.0
  %273 = vmatprep.subr.mxu0 0.0
  %274 = vmatpush1.msra.mxu0 0.0
  %275 = vmatprep.subr.mxu0 0.0
  %276 = vmatpush1.msra.mxu0 0.0
  %277 = vmatprep.subr.mxu0 0.0
  %278 = vmatpush1.msra.mxu0 0.0
  %279 = vmatprep.subr.mxu0 0.0
  %280 = vmatpush1.msra.mxu0 0.0
  %281 = vmatprep.subr.mxu0 0.0
  %282 = vmatpush1.msra.mxu0 0.0
  %283 = vmatprep.subr.mxu0 0.0
  %284 = vmatpush1.msra.mxu0 0.0
  %285 = vmatprep.subr.mxu0 0.0
  %286 = vmatpush1.msra.mxu0 0.0
  %287 = vmatprep.subr.mxu0 0.0
  %288 = vmatpush1.msra.mxu0 0.0
  %289 = vmatprep.mubr.f32.mxu0 0.0
  %290 = vmatmul.mubr.f32.gmra.mrb[0].mxu0 %v161
  %v291 = vpop.f32.mrb[0].mxu0
  %v292 = vadd.f32 %v63, %v291
  %v293 = vpop.f32.mrb[0].mxu0
  %294 = vmatprep.mubr.f32.mxu0 0.0
  %295 = vmatmul.mubr.f32.gmra.mrb[0].mxu0 %v163
  %v296 = vpop.f32.mrb[0].mxu0
  %v297 = vadd.f32 %v63, %v296
  %v298 = vpop.f32.mrb[0].mxu0
  %299 = vmatprep.mubr.f32.mxu0 0.0
  %300 = vmatmul.mubr.f32.gmra.mrb[0].mxu0 %v165
  %v301 = vpop.f32.mrb[0].mxu0
  %v302 = vadd.f32 %v63, %v301
  %v303 = vpop.f32.mrb[0].mxu0
  %304 = vmatprep.mubr.f32.mxu0 0.0
  %305 = vmatmul.mubr.f32.gmra.mrb[0].mxu0 %v167
  %v306 = vpop.f32.mrb[0].mxu0
  %v307 = vadd.f32 %v63, %v306
  %v308 = vpop.f32.mrb[0].mxu0
  %309 = vmatprep.mubr.f32.mxu0 0.0
  %310 = vmatmul.mubr.f32.gmra.mrb[0].mxu0 %v169
  %v311 = vpop.f32.mrb[0].mxu0
  %v312 = vadd.f32 %v63, %v311
  %v313 = vpop.f32.mrb[0].mxu0
  %314 = vmatprep.mubr.f32.mxu0 0.0
  %315 = vmatmul.mubr.f32.gmra.mrb[0].mxu0 %v171
  %v316 = vpop.f32.mrb[0].mxu0
  %v317 = vadd.f32 %v63, %v316
  %v318 = vpop.f32.mrb[0].mxu0
  %319 = vmatprep.mubr.f32.mxu0 0.0
  %320 = vmatmul.mubr.f32.gmra.mrb[0].mxu0 %v173
  %v321 = vpop.f32.mrb[0].mxu0
  %v322 = vadd.f32 %v63, %v321
  %v323 = vpop.f32.mrb[0].mxu0
  %324 = vmatprep.mubr.f32.mxu0 0.0
  %325 = vmatmul.mubr.f32.gmra.mrb[0].mxu0 %v175
  %v326 = vpop.f32.mrb[0].mxu0
  %v327 = vadd.f32 %v63, %v326
  %v328 = vpop.f32.mrb[0].mxu0
  %329 = vmatprep.mubr.f32.mxu0 0.0
  %330 = vmatmul.mubr.f32.gmra.mrb[0].mxu0 %v177
  %v331 = vpop.f32.mrb[0].mxu0
  %v332 = vadd.f32 %v63, %v331
  %v333 = vpop.f32.mrb[0].mxu0
  %334 = vmatprep.mubr.f32.mxu0 0.0
  %335 = vmatmul.mubr.f32.gmra.mrb[0].mxu0 %v179
  %v336 = vpop.f32.mrb[0].mxu0
  %v337 = vadd.f32 %v63, %v336
  %v338 = vpop.f32.mrb[0].mxu0
  %339 = vmatprep.mubr.f32.mxu0 0.0
  %340 = vmatmul.mubr.f32.gmra.mrb[0].mxu0 %v181
  %v341 = vpop.f32.mrb[0].mxu0
  %v342 = vadd.f32 %v63, %v341
  %v343 = vpop.f32.mrb[0].mxu0
  %344 = vmatprep.mubr.f32.mxu0 0.0
  %345 = vmatmul.mubr.f32.gmra.mrb[0].mxu0 %v183
  %v346 = vpop.f32.mrb[0].mxu0
  %v347 = vadd.f32 %v63, %v346
  %v348 = vpop.f32.mrb[0].mxu0
  %349 = vmatprep.mubr.f32.mxu0 0.0
  %350 = vmatmul.mubr.f32.gmra.mrb[0].mxu0 %v185
  %v351 = vpop.f32.mrb[0].mxu0
  %v352 = vadd.f32 %v63, %v351
  %v353 = vpop.f32.mrb[0].mxu0
  %354 = vmatprep.mubr.f32.mxu0 0.0
  %355 = vmatmul.mubr.f32.gmra.mrb[0].mxu0 %v187
  %v356 = vpop.f32.mrb[0].mxu0
  %v357 = vadd.f32 %v63, %v356
  %v358 = vpop.f32.mrb[0].mxu0
  %359 = vmatprep.mubr.f32.mxu0 0.0
  %360 = vmatmul.mubr.f32.gmra.mrb[0].mxu0 %v189
  %v361 = vpop.f32.mrb[0].mxu0
  %v362 = vadd.f32 %v63, %v361
  %v363 = vpop.f32.mrb[0].mxu0
  %364 = vmatprep.mubr.f32.mxu0 0.0
  %365 = vmatmul.mubr.f32.gmra.mrb[0].mxu0 %v191
  %v366 = vpop.f32.mrb[0].mxu0
  %v367 = vadd.f32 %v63, %v366
  %v368 = vpop.f32.mrb[0].mxu0
  %369 = vmatprep.mubr.f32.mxu0 0.0
  %370 = vmatmul.mubr.f32.gmra.mrb[0].mxu0 %v193
  %v371 = vpop.f32.mrb[0].mxu0
  %v372 = vadd.f32 %v63, %v371
  %v373 = vpop.f32.mrb[0].mxu0
  %374 = vmatprep.mubr.f32.mxu0 0.0
  %375 = vmatmul.mubr.f32.gmra.mrb[0].mxu0 %v195
  %v376 = vpop.f32.mrb[0].mxu0
  %v377 = vadd.f32 %v63, %v376
  %v378 = vpop.f32.mrb[0].mxu0
  %379 = vmatprep.mubr.f32.mxu0 0.0
  %380 = vmatmul.mubr.f32.gmra.mrb[0].mxu0 %v197
  %v381 = vpop.f32.mrb[0].mxu0
  %v382 = vadd.f32 %v63, %v381
  %v383 = vpop.f32.mrb[0].mxu0
  %384 = vmatprep.mubr.f32.mxu0 0.0
  %385 = vmatmul.mubr.f32.gmra.mrb[0].mxu0 %v199
  %v386 = vpop.f32.mrb[0].mxu0
  %v387 = vadd.f32 %v63, %v386
  %v388 = vpop.f32.mrb[0].mxu0
  %389 = vmatprep.mubr.f32.mxu0 0.0
  %390 = vmatmul.mubr.f32.gmra.mrb[0].mxu0 %v201
  %v391 = vpop.f32.mrb[0].mxu0
  %v392 = vadd.f32 %v63, %v391
  %v393 = vpop.f32.mrb[0].mxu0
  %394 = vmatprep.mubr.f32.mxu0 0.0
  %395 = vmatmul.mubr.f32.gmra.mrb[0].mxu0 %v203
  %v396 = vpop.f32.mrb[0].mxu0
  %v397 = vadd.f32 %v63, %v396
  %v398 = vpop.f32.mrb[0].mxu0
  %399 = vmatprep.mubr.f32.mxu0 0.0
  %400 = vmatmul.mubr.f32.gmra.mrb[0].mxu0 %v205
  %v401 = vpop.f32.mrb[0].mxu0
  %v402 = vadd.f32 %v63, %v401
  %v403 = vpop.f32.mrb[0].mxu0
  %404 = vmatprep.mubr.f32.mxu0 0.0
  %405 = vmatmul.mubr.f32.gmra.mrb[0].mxu0 %v207
  %v406 = vpop.f32.mrb[0].mxu0
  %v407 = vadd.f32 %v63, %v406
  %v408 = vpop.f32.mrb[0].mxu0
  %409 = vmatprep.mubr.f32.mxu0 0.0
  %410 = vmatmul.mubr.f32.gmra.mrb[0].mxu0 %v209
  %v411 = vpop.f32.mrb[0].mxu0
  %v412 = vadd.f32 %v63, %v411
  %v413 = vpop.f32.mrb[0].mxu0
  %414 = vmatprep.mubr.f32.mxu0 0.0
  %415 = vmatmul.mubr.f32.gmra.mrb[0].mxu0 %v211
  %v416 = vpop.f32.mrb[0].mxu0
  %v417 = vadd.f32 %v63, %v416
  %v418 = vpop.f32.mrb[0].mxu0
  %419 = vmatprep.mubr.f32.mxu0 0.0
  %420 = vmatmul.mubr.f32.gmra.mrb[0].mxu0 %v213
  %v421 = vpop.f32.mrb[0].mxu0
  %v422 = vadd.f32 %v63, %v421
  %v423 = vpop.f32.mrb[0].mxu0
  %424 = vmatprep.mubr.f32.mxu0 0.0
  %425 = vmatmul.mubr.f32.gmra.mrb[0].mxu0 %v215
  %v426 = vpop.f32.mrb[0].mxu0
  %v427 = vadd.f32 %v63, %v426
  %v428 = vpop.f32.mrb[0].mxu0
  %429 = vmatprep.mubr.f32.mxu0 0.0
  %430 = vmatmul.mubr.f32.gmra.mrb[0].mxu0 %v217
  %v431 = vpop.f32.mrb[0].mxu0
  %v432 = vadd.f32 %v63, %v431
  %v433 = vpop.f32.mrb[0].mxu0
  %434 = vmatprep.mubr.f32.mxu0 0.0
  %435 = vmatmul.mubr.f32.gmra.mrb[0].mxu0 %v219
  %v436 = vpop.f32.mrb[0].mxu0
  %v437 = vadd.f32 %v63, %v436
  %v438 = vpop.f32.mrb[0].mxu0
  %439 = vmatprep.mubr.f32.mxu0 0.0
  %440 = vmatmul.mubr.f32.gmra.mrb[0].mxu0 %v221
  %v441 = vpop.f32.mrb[0].mxu0
  %v442 = vadd.f32 %v63, %v441
  %v443 = vpop.f32.mrb[0].mxu0
  %444 = vmatprep.mubr.f32.mxu0 0.0
  %445 = vmatmul.mubr.f32.gmra.mrb[0].mxu0 %v223
  %v446 = vpop.f32.mrb[0].mxu0
  %v447 = vadd.f32 %v63, %v446
  %v448 = vpop.f32.mrb[0].mxu0
  %449 = vdwg.mxu0
  %v450 = vtanh.pop %v292
  %v451 = vtanh.pop %v297
  %v452 = vtanh.pop %v302
  %v453 = vtanh.pop %v307
  %v454 = vtanh.pop %v312
  %v455 = vtanh.pop %v317
  %v456 = vtanh.pop %v322
  %v457 = vtanh.pop %v327
  %v458 = vtanh.pop %v332
  %v459 = vtanh.pop %v337
  %v460 = vtanh.pop %v342
  %v461 = vtanh.pop %v347
  %v462 = vtanh.pop %v352
  %v463 = vtanh.pop %v357
  %v464 = vtanh.pop %v362
  %v465 = vtanh.pop %v367
  %v466 = vtanh.pop %v372
  %v467 = vtanh.pop %v377
  %v468 = vtanh.pop %v382
  %v469 = vtanh.pop %v387
  %v470 = vtanh.pop %v392
  %v471 = vtanh.pop %v397
  %v472 = vtanh.pop %v402
  %v473 = vtanh.pop %v407
  %v474 = vtanh.pop %v412
  %v475 = vtanh.pop %v417
  %v476 = vtanh.pop %v422
  %v477 = vtanh.pop %v427
  %v478 = vtanh.pop %v432
  %v479 = vtanh.pop %v437
  %v480 = vtanh.pop %v442
  %v481 = vtanh.pop %v447
  %v482 = vlaneseq
  %v483 = vshrl.u32 %v482, 7
  %v484 = vsub.s32 0, %v483
  %v485 = vrot.slane %v59, %v484
  %vm486 = vcmask 261120
  %v488 = vsel %vm486, %v450, 0
  %v491 = vsel %vm486, %v451, 0
  %v494 = vsel %vm486, %v452, 0
  %v497 = vsel %vm486, %v453, 0
  %v500 = vsel %vm486, %v454, 0
  %v503 = vsel %vm486, %v455, 0
  %v506 = vsel %vm486, %v456, 0
  %v509 = vsel %vm486, %v457, 0
  %v512 = vsel %vm486, %v458, 0
  %v515 = vsel %vm486, %v459, 0
  %v518 = vsel %vm486, %v460, 0
  %v521 = vsel %vm486, %v461, 0
  %v524 = vsel %vm486, %v462, 0
  %v527 = vsel %vm486, %v463, 0
  %v530 = vsel %vm486, %v464, 0
  %v533 = vsel %vm486, %v465, 0
  %v536 = vsel %vm486, %v466, 0
  %v539 = vsel %vm486, %v467, 0
  %v542 = vsel %vm486, %v468, 0
  %v545 = vsel %vm486, %v469, 0
  %v548 = vsel %vm486, %v470, 0
  %v551 = vsel %vm486, %v471, 0
  %v554 = vsel %vm486, %v472, 0
  %v557 = vsel %vm486, %v473, 0
  %v560 = vsel %vm486, %v474, 0
  %v563 = vsel %vm486, %v475, 0
  %v566 = vsel %vm486, %v476, 0
  %v569 = vsel %vm486, %v477, 0
  %v572 = vsel %vm486, %v478, 0
  %v575 = vsel %vm486, %v479, 0
  %v578 = vsel %vm486, %v480, 0
  %v581 = vsel %vm486, %v481, 0
  %583 = vmatprep.subr.mxu0 0.0
  %584 = vmatpush1.msra.mxu0 %v54
  %585 = vmatprep.subr.mxu0 0.0
  %586 = vmatpush1.msra.mxu0 %v55
  %587 = vmatprep.subr.mxu0 0.0
  %588 = vmatpush1.msra.mxu0 %v56
  %589 = vmatprep.subr.mxu0 0.0
  %590 = vmatpush1.msra.mxu0 %v57
  %591 = vmatprep.subr.mxu0 0.0
  %592 = vmatpush1.msra.mxu0 0.0
  %593 = vmatprep.subr.mxu0 0.0
  %594 = vmatpush1.msra.mxu0 0.0
  %595 = vmatprep.subr.mxu0 0.0
  %596 = vmatpush1.msra.mxu0 0.0
  %597 = vmatprep.subr.mxu0 0.0
  %598 = vmatpush1.msra.mxu0 0.0
  %599 = vmatprep.subr.mxu0 0.0
  %600 = vmatpush1.msra.mxu0 0.0
  %601 = vmatprep.subr.mxu0 0.0
  %602 = vmatpush1.msra.mxu0 0.0
  %603 = vmatprep.subr.mxu0 0.0
  %604 = vmatpush1.msra.mxu0 0.0
  %605 = vmatprep.subr.mxu0 0.0
  %606 = vmatpush1.msra.mxu0 0.0
  %607 = vmatprep.subr.mxu0 0.0
  %608 = vmatpush1.msra.mxu0 0.0
  %609 = vmatprep.subr.mxu0 0.0
  %610 = vmatpush1.msra.mxu0 0.0
  %611 = vmatprep.subr.mxu0 0.0
  %612 = vmatpush1.msra.mxu0 0.0
  %613 = vmatprep.subr.mxu0 0.0
  %614 = vmatpush1.msra.mxu0 0.0
  %615 = vmatprep.subr.mxu0 0.0
  %616 = vmatpush1.msra.mxu0 0.0
  %617 = vmatprep.subr.mxu0 0.0
  %618 = vmatpush1.msra.mxu0 0.0
  %619 = vmatprep.subr.mxu0 0.0
  %620 = vmatpush1.msra.mxu0 0.0
  %621 = vmatprep.subr.mxu0 0.0
  %622 = vmatpush1.msra.mxu0 0.0
  %623 = vmatprep.subr.mxu0 0.0
  %624 = vmatpush1.msra.mxu0 0.0
  %625 = vmatprep.subr.mxu0 0.0
  %626 = vmatpush1.msra.mxu0 0.0
  %627 = vmatprep.subr.mxu0 0.0
  %628 = vmatpush1.msra.mxu0 0.0
  %629 = vmatprep.subr.mxu0 0.0
  %630 = vmatpush1.msra.mxu0 0.0
  %631 = vmatprep.subr.mxu0 0.0
  %632 = vmatpush1.msra.mxu0 0.0
  %633 = vmatprep.subr.mxu0 0.0
  %634 = vmatpush1.msra.mxu0 0.0
  %635 = vmatprep.subr.mxu0 0.0
  %636 = vmatpush1.msra.mxu0 0.0
  %637 = vmatprep.subr.mxu0 0.0
  %638 = vmatpush1.msra.mxu0 0.0
  %639 = vmatprep.subr.mxu0 0.0
  %640 = vmatpush1.msra.mxu0 0.0
  %641 = vmatprep.subr.mxu0 0.0
  %642 = vmatpush1.msra.mxu0 0.0
  %643 = vmatprep.subr.mxu0 0.0
  %644 = vmatpush1.msra.mxu0 0.0
  %645 = vmatprep.subr.mxu0 0.0
  %646 = vmatpush1.msra.mxu0 0.0
  %647 = vmatprep.mubr.f32.mxu0 0.0
  %648 = vmatmul.mubr.f32.gmra.mrb[0].mxu0 %v488
  %v649 = vpop.f32.mrb[0].mxu0
  %v650 = vadd.f32 %v485, %v649
  %v651 = vpop.f32.mrb[0].mxu0
  %652 = vmatprep.mubr.f32.mxu0 0.0
  %653 = vmatmul.mubr.f32.gmra.mrb[0].mxu0 %v491
  %v654 = vpop.f32.mrb[0].mxu0
  %v655 = vadd.f32 %v485, %v654
  %v656 = vpop.f32.mrb[0].mxu0
  %657 = vmatprep.mubr.f32.mxu0 0.0
  %658 = vmatmul.mubr.f32.gmra.mrb[0].mxu0 %v494
  %v659 = vpop.f32.mrb[0].mxu0
  %v660 = vadd.f32 %v485, %v659
  %v661 = vpop.f32.mrb[0].mxu0
  %662 = vmatprep.mubr.f32.mxu0 0.0
  %663 = vmatmul.mubr.f32.gmra.mrb[0].mxu0 %v497
  %v664 = vpop.f32.mrb[0].mxu0
  %v665 = vadd.f32 %v485, %v664
  %v666 = vpop.f32.mrb[0].mxu0
  %667 = vmatprep.mubr.f32.mxu0 0.0
  %668 = vmatmul.mubr.f32.gmra.mrb[0].mxu0 %v500
  %v669 = vpop.f32.mrb[0].mxu0
  %v670 = vadd.f32 %v485, %v669
  %v671 = vpop.f32.mrb[0].mxu0
  %672 = vmatprep.mubr.f32.mxu0 0.0
  %673 = vmatmul.mubr.f32.gmra.mrb[0].mxu0 %v503
  %v674 = vpop.f32.mrb[0].mxu0
  %v675 = vadd.f32 %v485, %v674
  %v676 = vpop.f32.mrb[0].mxu0
  %677 = vmatprep.mubr.f32.mxu0 0.0
  %678 = vmatmul.mubr.f32.gmra.mrb[0].mxu0 %v506
  %v679 = vpop.f32.mrb[0].mxu0
  %v680 = vadd.f32 %v485, %v679
  %v681 = vpop.f32.mrb[0].mxu0
  %682 = vmatprep.mubr.f32.mxu0 0.0
  %683 = vmatmul.mubr.f32.gmra.mrb[0].mxu0 %v509
  %v684 = vpop.f32.mrb[0].mxu0
  %v685 = vadd.f32 %v485, %v684
  %v686 = vpop.f32.mrb[0].mxu0
  %687 = vmatprep.mubr.f32.mxu0 0.0
  %688 = vmatmul.mubr.f32.gmra.mrb[0].mxu0 %v512
  %v689 = vpop.f32.mrb[0].mxu0
  %v690 = vadd.f32 %v485, %v689
  %v691 = vpop.f32.mrb[0].mxu0
  %692 = vmatprep.mubr.f32.mxu0 0.0
  %693 = vmatmul.mubr.f32.gmra.mrb[0].mxu0 %v515
  %v694 = vpop.f32.mrb[0].mxu0
  %v695 = vadd.f32 %v485, %v694
  %v696 = vpop.f32.mrb[0].mxu0
  %697 = vmatprep.mubr.f32.mxu0 0.0
  %698 = vmatmul.mubr.f32.gmra.mrb[0].mxu0 %v518
  %v699 = vpop.f32.mrb[0].mxu0
  %v700 = vadd.f32 %v485, %v699
  %v701 = vpop.f32.mrb[0].mxu0
  %702 = vmatprep.mubr.f32.mxu0 0.0
  %703 = vmatmul.mubr.f32.gmra.mrb[0].mxu0 %v521
  %v704 = vpop.f32.mrb[0].mxu0
  %v705 = vadd.f32 %v485, %v704
  %v706 = vpop.f32.mrb[0].mxu0
  %707 = vmatprep.mubr.f32.mxu0 0.0
  %708 = vmatmul.mubr.f32.gmra.mrb[0].mxu0 %v524
  %v709 = vpop.f32.mrb[0].mxu0
  %v710 = vadd.f32 %v485, %v709
  %v711 = vpop.f32.mrb[0].mxu0
  %712 = vmatprep.mubr.f32.mxu0 0.0
  %713 = vmatmul.mubr.f32.gmra.mrb[0].mxu0 %v527
  %v714 = vpop.f32.mrb[0].mxu0
  %v715 = vadd.f32 %v485, %v714
  %v716 = vpop.f32.mrb[0].mxu0
  %717 = vmatprep.mubr.f32.mxu0 0.0
  %718 = vmatmul.mubr.f32.gmra.mrb[0].mxu0 %v530
  %v719 = vpop.f32.mrb[0].mxu0
  %v720 = vadd.f32 %v485, %v719
  %v721 = vpop.f32.mrb[0].mxu0
  %722 = vmatprep.mubr.f32.mxu0 0.0
  %723 = vmatmul.mubr.f32.gmra.mrb[0].mxu0 %v533
  %v724 = vpop.f32.mrb[0].mxu0
  %v725 = vadd.f32 %v485, %v724
  %v726 = vpop.f32.mrb[0].mxu0
  %727 = vmatprep.mubr.f32.mxu0 0.0
  %728 = vmatmul.mubr.f32.gmra.mrb[0].mxu0 %v536
  %v729 = vpop.f32.mrb[0].mxu0
  %v730 = vadd.f32 %v485, %v729
  %v731 = vpop.f32.mrb[0].mxu0
  %732 = vmatprep.mubr.f32.mxu0 0.0
  %733 = vmatmul.mubr.f32.gmra.mrb[0].mxu0 %v539
  %v734 = vpop.f32.mrb[0].mxu0
  %v735 = vadd.f32 %v485, %v734
  %v736 = vpop.f32.mrb[0].mxu0
  %737 = vmatprep.mubr.f32.mxu0 0.0
  %738 = vmatmul.mubr.f32.gmra.mrb[0].mxu0 %v542
  %v739 = vpop.f32.mrb[0].mxu0
  %v740 = vadd.f32 %v485, %v739
  %v741 = vpop.f32.mrb[0].mxu0
  %742 = vmatprep.mubr.f32.mxu0 0.0
  %743 = vmatmul.mubr.f32.gmra.mrb[0].mxu0 %v545
  %v744 = vpop.f32.mrb[0].mxu0
  %v745 = vadd.f32 %v485, %v744
  %v746 = vpop.f32.mrb[0].mxu0
  %747 = vmatprep.mubr.f32.mxu0 0.0
  %748 = vmatmul.mubr.f32.gmra.mrb[0].mxu0 %v548
  %v749 = vpop.f32.mrb[0].mxu0
  %v750 = vadd.f32 %v485, %v749
  %v751 = vpop.f32.mrb[0].mxu0
  %752 = vmatprep.mubr.f32.mxu0 0.0
  %753 = vmatmul.mubr.f32.gmra.mrb[0].mxu0 %v551
  %v754 = vpop.f32.mrb[0].mxu0
  %v755 = vadd.f32 %v485, %v754
  %v756 = vpop.f32.mrb[0].mxu0
  %757 = vmatprep.mubr.f32.mxu0 0.0
  %758 = vmatmul.mubr.f32.gmra.mrb[0].mxu0 %v554
  %v759 = vpop.f32.mrb[0].mxu0
  %v760 = vadd.f32 %v485, %v759
  %v761 = vpop.f32.mrb[0].mxu0
  %762 = vmatprep.mubr.f32.mxu0 0.0
  %763 = vmatmul.mubr.f32.gmra.mrb[0].mxu0 %v557
  %v764 = vpop.f32.mrb[0].mxu0
  %v765 = vadd.f32 %v485, %v764
  %v766 = vpop.f32.mrb[0].mxu0
  %767 = vmatprep.mubr.f32.mxu0 0.0
  %768 = vmatmul.mubr.f32.gmra.mrb[0].mxu0 %v560
  %v769 = vpop.f32.mrb[0].mxu0
  %v770 = vadd.f32 %v485, %v769
  %v771 = vpop.f32.mrb[0].mxu0
  %772 = vmatprep.mubr.f32.mxu0 0.0
  %773 = vmatmul.mubr.f32.gmra.mrb[0].mxu0 %v563
  %v774 = vpop.f32.mrb[0].mxu0
  %v775 = vadd.f32 %v485, %v774
  %v776 = vpop.f32.mrb[0].mxu0
  %777 = vmatprep.mubr.f32.mxu0 0.0
  %778 = vmatmul.mubr.f32.gmra.mrb[0].mxu0 %v566
  %v779 = vpop.f32.mrb[0].mxu0
  %v780 = vadd.f32 %v485, %v779
  %v781 = vpop.f32.mrb[0].mxu0
  %782 = vmatprep.mubr.f32.mxu0 0.0
  %783 = vmatmul.mubr.f32.gmra.mrb[0].mxu0 %v569
  %v784 = vpop.f32.mrb[0].mxu0
  %v785 = vadd.f32 %v485, %v784
  %v786 = vpop.f32.mrb[0].mxu0
  %787 = vmatprep.mubr.f32.mxu0 0.0
  %788 = vmatmul.mubr.f32.gmra.mrb[0].mxu0 %v572
  %v789 = vpop.f32.mrb[0].mxu0
  %v790 = vadd.f32 %v485, %v789
  %v791 = vpop.f32.mrb[0].mxu0
  %792 = vmatprep.mubr.f32.mxu0 0.0
  %793 = vmatmul.mubr.f32.gmra.mrb[0].mxu0 %v575
  %v794 = vpop.f32.mrb[0].mxu0
  %v795 = vadd.f32 %v485, %v794
  %v796 = vpop.f32.mrb[0].mxu0
  %797 = vmatprep.mubr.f32.mxu0 0.0
  %798 = vmatmul.mubr.f32.gmra.mrb[0].mxu0 %v578
  %v799 = vpop.f32.mrb[0].mxu0
  %v800 = vadd.f32 %v485, %v799
  %v801 = vpop.f32.mrb[0].mxu0
  %802 = vmatprep.mubr.f32.mxu0 0.0
  %803 = vmatmul.mubr.f32.gmra.mrb[0].mxu0 %v581
  %v804 = vpop.f32.mrb[0].mxu0
  %v805 = vadd.f32 %v485, %v804
  %v806 = vpop.f32.mrb[0].mxu0
  %807 = vdwg.mxu0
  %v808 = vadd.f32 %v20, %v650
  %v809 = vadd.f32 %v21, %v655
  %v810 = vadd.f32 %v22, %v660
  %v811 = vadd.f32 %v23, %v665
  %v812 = vadd.f32 %v24, %v670
  %v813 = vadd.f32 %v25, %v675
  %v814 = vadd.f32 %v26, %v680
  %v815 = vadd.f32 %v27, %v685
  %v816 = vadd.f32 %v28, %v690
  %v817 = vadd.f32 %v29, %v695
  %v818 = vadd.f32 %v30, %v700
  %v819 = vadd.f32 %v31, %v705
  %v820 = vadd.f32 %v32, %v710
  %v821 = vadd.f32 %v33, %v715
  %v822 = vadd.f32 %v34, %v720
  %v823 = vadd.f32 %v35, %v725
  %v824 = vadd.f32 %v36, %v730
  %v825 = vadd.f32 %v37, %v735
  %v826 = vadd.f32 %v38, %v740
  %v827 = vadd.f32 %v39, %v745
  %v828 = vadd.f32 %v40, %v750
  %v829 = vadd.f32 %v41, %v755
  %v830 = vadd.f32 %v42, %v760
  %v831 = vadd.f32 %v43, %v765
  %v832 = vadd.f32 %v44, %v770
  %v833 = vadd.f32 %v45, %v775
  %v834 = vadd.f32 %v46, %v780
  %v835 = vadd.f32 %v47, %v785
  %v836 = vadd.f32 %v48, %v790
  %v837 = vadd.f32 %v49, %v795
  %v838 = vadd.f32 %v50, %v800
  %v839 = vadd.f32 %v51, %v805
  %s840 = scalar_lea.vmem %s1, 16
  %v841 = vld [vmem:[%s840] sm:$0xff]
  %v842 = vld [vmem:[%s840 + $0x8] sm:$0xff]
  %s843 = scalar_lea.vmem %s3, 32
  %v844 = vld [vmem:[%s843] sm:$0xff]
  %v845 = vld [vmem:[%s843 + $0x8] sm:$0xff]
  %v846 = vld [vmem:[%s843 + $0x10] sm:$0xff]
  %v847 = vld [vmem:[%s843 + $0x18] sm:$0xff]
  %v848 = vld [vmem:[%s2 + $0x1] sm:$0x1]
  %v849 = vld [vmem:[%s4 + $0x1] sm:$0x1]
  %v850 = vlaneseq
  %v851 = vshrl.u32 %v850, 7
  %v852 = vsub.s32 0, %v851
  %v853 = vrot.slane %v848, %v852
  %v855 = vsel %vm160, %v808, 0
  %v858 = vsel %vm160, %v809, 0
  %v861 = vsel %vm160, %v810, 0
  %v864 = vsel %vm160, %v811, 0
  %v867 = vsel %vm160, %v812, 0
  %v870 = vsel %vm160, %v813, 0
  %v873 = vsel %vm160, %v814, 0
  %v876 = vsel %vm160, %v815, 0
  %v879 = vsel %vm160, %v816, 0
  %v882 = vsel %vm160, %v817, 0
  %v885 = vsel %vm160, %v818, 0
  %v888 = vsel %vm160, %v819, 0
  %v891 = vsel %vm160, %v820, 0
  %v894 = vsel %vm160, %v821, 0
  %v897 = vsel %vm160, %v822, 0
  %v900 = vsel %vm160, %v823, 0
  %v903 = vsel %vm160, %v824, 0
  %v906 = vsel %vm160, %v825, 0
  %v909 = vsel %vm160, %v826, 0
  %v912 = vsel %vm160, %v827, 0
  %v915 = vsel %vm160, %v828, 0
  %v918 = vsel %vm160, %v829, 0
  %v921 = vsel %vm160, %v830, 0
  %v924 = vsel %vm160, %v831, 0
  %v927 = vsel %vm160, %v832, 0
  %v930 = vsel %vm160, %v833, 0
  %v933 = vsel %vm160, %v834, 0
  %v936 = vsel %vm160, %v835, 0
  %v939 = vsel %vm160, %v836, 0
  %v942 = vsel %vm160, %v837, 0
  %v945 = vsel %vm160, %v838, 0
  %v948 = vsel %vm160, %v839, 0
  %950 = vmatprep.subr.mxu0 0.0
  %951 = vmatpush1.msra.mxu0 %v841
  %952 = vmatprep.subr.mxu0 0.0
  %953 = vmatpush1.msra.mxu0 %v842
  %954 = vmatprep.subr.mxu0 0.0
  %955 = vmatpush1.msra.mxu0 0.0
  %956 = vmatprep.subr.mxu0 0.0
  %957 = vmatpush1.msra.mxu0 0.0
  %958 = vmatprep.subr.mxu0 0.0
  %959 = vmatpush1.msra.mxu0 0.0
  %960 = vmatprep.subr.mxu0 0.0
  %961 = vmatpush1.msra.mxu0 0.0
  %962 = vmatprep.subr.mxu0 0.0
  %963 = vmatpush1.msra.mxu0 0.0
  %964 = vmatprep.subr.mxu0 0.0
  %965 = vmatpush1.msra.mxu0 0.0
  %966 = vmatprep.subr.mxu0 0.0
  %967 = vmatpush1.msra.mxu0 0.0
  %968 = vmatprep.subr.mxu0 0.0
  %969 = vmatpush1.msra.mxu0 0.0
  %970 = vmatprep.subr.mxu0 0.0
  %971 = vmatpush1.msra.mxu0 0.0
  %972 = vmatprep.subr.mxu0 0.0
  %973 = vmatpush1.msra.mxu0 0.0
  %974 = vmatprep.subr.mxu0 0.0
  %975 = vmatpush1.msra.mxu0 0.0
  %976 = vmatprep.subr.mxu0 0.0
  %977 = vmatpush1.msra.mxu0 0.0
  %978 = vmatprep.subr.mxu0 0.0
  %979 = vmatpush1.msra.mxu0 0.0
  %980 = vmatprep.subr.mxu0 0.0
  %981 = vmatpush1.msra.mxu0 0.0
  %982 = vmatprep.subr.mxu0 0.0
  %983 = vmatpush1.msra.mxu0 0.0
  %984 = vmatprep.subr.mxu0 0.0
  %985 = vmatpush1.msra.mxu0 0.0
  %986 = vmatprep.subr.mxu0 0.0
  %987 = vmatpush1.msra.mxu0 0.0
  %988 = vmatprep.subr.mxu0 0.0
  %989 = vmatpush1.msra.mxu0 0.0
  %990 = vmatprep.subr.mxu0 0.0
  %991 = vmatpush1.msra.mxu0 0.0
  %992 = vmatprep.subr.mxu0 0.0
  %993 = vmatpush1.msra.mxu0 0.0
  %994 = vmatprep.subr.mxu0 0.0
  %995 = vmatpush1.msra.mxu0 0.0
  %996 = vmatprep.subr.mxu0 0.0
  %997 = vmatpush1.msra.mxu0 0.0
  %998 = vmatprep.subr.mxu0 0.0
  %999 = vmatpush1.msra.mxu0 0.0
  %1000 = vmatprep.subr.mxu0 0.0
  %1001 = vmatpush1.msra.mxu0 0.0
  %1002 = vmatprep.subr.mxu0 0.0
  %1003 = vmatpush1.msra.mxu0 0.0
  %1004 = vmatprep.subr.mxu0 0.0
  %1005 = vmatpush1.msra.mxu0 0.0
  %1006 = vmatprep.subr.mxu0 0.0
  %1007 = vmatpush1.msra.mxu0 0.0
  %1008 = vmatprep.subr.mxu0 0.0
  %1009 = vmatpush1.msra.mxu0 0.0
  %1010 = vmatprep.subr.mxu0 0.0
  %1011 = vmatpush1.msra.mxu0 0.0
  %1012 = vmatprep.subr.mxu0 0.0
  %1013 = vmatpush1.msra.mxu0 0.0
  %1014 = vmatprep.mubr.f32.mxu0 0.0
  %1015 = vmatmul.mubr.f32.gmra.mrb[0].mxu0 %v855
  %v1016 = vpop.f32.mrb[0].mxu0
  %v1017 = vadd.f32 %v853, %v1016
  %v1018 = vpop.f32.mrb[0].mxu0
  %1019 = vmatprep.mubr.f32.mxu0 0.0
  %1020 = vmatmul.mubr.f32.gmra.mrb[0].mxu0 %v858
  %v1021 = vpop.f32.mrb[0].mxu0
  %v1022 = vadd.f32 %v853, %v1021
  %v1023 = vpop.f32.mrb[0].mxu0
  %1024 = vmatprep.mubr.f32.mxu0 0.0
  %1025 = vmatmul.mubr.f32.gmra.mrb[0].mxu0 %v861
  %v1026 = vpop.f32.mrb[0].mxu0
  %v1027 = vadd.f32 %v853, %v1026
  %v1028 = vpop.f32.mrb[0].mxu0
  %1029 = vmatprep.mubr.f32.mxu0 0.0
  %1030 = vmatmul.mubr.f32.gmra.mrb[0].mxu0 %v864
  %v1031 = vpop.f32.mrb[0].mxu0
  %v1032 = vadd.f32 %v853, %v1031
  %v1033 = vpop.f32.mrb[0].mxu0
  %1034 = vmatprep.mubr.f32.mxu0 0.0
  %1035 = vmatmul.mubr.f32.gmra.mrb[0].mxu0 %v867
  %v1036 = vpop.f32.mrb[0].mxu0
  %v1037 = vadd.f32 %v853, %v1036
  %v1038 = vpop.f32.mrb[0].mxu0
  %1039 = vmatprep.mubr.f32.mxu0 0.0
  %1040 = vmatmul.mubr.f32.gmra.mrb[0].mxu0 %v870
  %v1041 = vpop.f32.mrb[0].mxu0
  %v1042 = vadd.f32 %v853, %v1041
  %v1043 = vpop.f32.mrb[0].mxu0
  %1044 = vmatprep.mubr.f32.mxu0 0.0
  %1045 = vmatmul.mubr.f32.gmra.mrb[0].mxu0 %v873
  %v1046 = vpop.f32.mrb[0].mxu0
  %v1047 = vadd.f32 %v853, %v1046
  %v1048 = vpop.f32.mrb[0].mxu0
  %1049 = vmatprep.mubr.f32.mxu0 0.0
  %1050 = vmatmul.mubr.f32.gmra.mrb[0].mxu0 %v876
  %v1051 = vpop.f32.mrb[0].mxu0
  %v1052 = vadd.f32 %v853, %v1051
  %v1053 = vpop.f32.mrb[0].mxu0
  %1054 = vmatprep.mubr.f32.mxu0 0.0
  %1055 = vmatmul.mubr.f32.gmra.mrb[0].mxu0 %v879
  %v1056 = vpop.f32.mrb[0].mxu0
  %v1057 = vadd.f32 %v853, %v1056
  %v1058 = vpop.f32.mrb[0].mxu0
  %1059 = vmatprep.mubr.f32.mxu0 0.0
  %1060 = vmatmul.mubr.f32.gmra.mrb[0].mxu0 %v882
  %v1061 = vpop.f32.mrb[0].mxu0
  %v1062 = vadd.f32 %v853, %v1061
  %v1063 = vpop.f32.mrb[0].mxu0
  %1064 = vmatprep.mubr.f32.mxu0 0.0
  %1065 = vmatmul.mubr.f32.gmra.mrb[0].mxu0 %v885
  %v1066 = vpop.f32.mrb[0].mxu0
  %v1067 = vadd.f32 %v853, %v1066
  %v1068 = vpop.f32.mrb[0].mxu0
  %1069 = vmatprep.mubr.f32.mxu0 0.0
  %1070 = vmatmul.mubr.f32.gmra.mrb[0].mxu0 %v888
  %v1071 = vpop.f32.mrb[0].mxu0
  %v1072 = vadd.f32 %v853, %v1071
  %v1073 = vpop.f32.mrb[0].mxu0
  %1074 = vmatprep.mubr.f32.mxu0 0.0
  %1075 = vmatmul.mubr.f32.gmra.mrb[0].mxu0 %v891
  %v1076 = vpop.f32.mrb[0].mxu0
  %v1077 = vadd.f32 %v853, %v1076
  %v1078 = vpop.f32.mrb[0].mxu0
  %1079 = vmatprep.mubr.f32.mxu0 0.0
  %1080 = vmatmul.mubr.f32.gmra.mrb[0].mxu0 %v894
  %v1081 = vpop.f32.mrb[0].mxu0
  %v1082 = vadd.f32 %v853, %v1081
  %v1083 = vpop.f32.mrb[0].mxu0
  %1084 = vmatprep.mubr.f32.mxu0 0.0
  %1085 = vmatmul.mubr.f32.gmra.mrb[0].mxu0 %v897
  %v1086 = vpop.f32.mrb[0].mxu0
  %v1087 = vadd.f32 %v853, %v1086
  %v1088 = vpop.f32.mrb[0].mxu0
  %1089 = vmatprep.mubr.f32.mxu0 0.0
  %1090 = vmatmul.mubr.f32.gmra.mrb[0].mxu0 %v900
  %v1091 = vpop.f32.mrb[0].mxu0
  %v1092 = vadd.f32 %v853, %v1091
  %v1093 = vpop.f32.mrb[0].mxu0
  %1094 = vmatprep.mubr.f32.mxu0 0.0
  %1095 = vmatmul.mubr.f32.gmra.mrb[0].mxu0 %v903
  %v1096 = vpop.f32.mrb[0].mxu0
  %v1097 = vadd.f32 %v853, %v1096
  %v1098 = vpop.f32.mrb[0].mxu0
  %1099 = vmatprep.mubr.f32.mxu0 0.0
  %1100 = vmatmul.mubr.f32.gmra.mrb[0].mxu0 %v906
  %v1101 = vpop.f32.mrb[0].mxu0
  %v1102 = vadd.f32 %v853, %v1101
  %v1103 = vpop.f32.mrb[0].mxu0
  %1104 = vmatprep.mubr.f32.mxu0 0.0
  %1105 = vmatmul.mubr.f32.gmra.mrb[0].mxu0 %v909
  %v1106 = vpop.f32.mrb[0].mxu0
  %v1107 = vadd.f32 %v853, %v1106
  %v1108 = vpop.f32.mrb[0].mxu0
  %1109 = vmatprep.mubr.f32.mxu0 0.0
  %1110 = vmatmul.mubr.f32.gmra.mrb[0].mxu0 %v912
  %v1111 = vpop.f32.mrb[0].mxu0
  %v1112 = vadd.f32 %v853, %v1111
  %v1113 = vpop.f32.mrb[0].mxu0
  %1114 = vmatprep.mubr.f32.mxu0 0.0
  %1115 = vmatmul.mubr.f32.gmra.mrb[0].mxu0 %v915
  %v1116 = vpop.f32.mrb[0].mxu0
  %v1117 = vadd.f32 %v853, %v1116
  %v1118 = vpop.f32.mrb[0].mxu0
  %1119 = vmatprep.mubr.f32.mxu0 0.0
  %1120 = vmatmul.mubr.f32.gmra.mrb[0].mxu0 %v918
  %v1121 = vpop.f32.mrb[0].mxu0
  %v1122 = vadd.f32 %v853, %v1121
  %v1123 = vpop.f32.mrb[0].mxu0
  %1124 = vmatprep.mubr.f32.mxu0 0.0
  %1125 = vmatmul.mubr.f32.gmra.mrb[0].mxu0 %v921
  %v1126 = vpop.f32.mrb[0].mxu0
  %v1127 = vadd.f32 %v853, %v1126
  %v1128 = vpop.f32.mrb[0].mxu0
  %1129 = vmatprep.mubr.f32.mxu0 0.0
  %1130 = vmatmul.mubr.f32.gmra.mrb[0].mxu0 %v924
  %v1131 = vpop.f32.mrb[0].mxu0
  %v1132 = vadd.f32 %v853, %v1131
  %v1133 = vpop.f32.mrb[0].mxu0
  %1134 = vmatprep.mubr.f32.mxu0 0.0
  %1135 = vmatmul.mubr.f32.gmra.mrb[0].mxu0 %v927
  %v1136 = vpop.f32.mrb[0].mxu0
  %v1137 = vadd.f32 %v853, %v1136
  %v1138 = vpop.f32.mrb[0].mxu0
  %1139 = vmatprep.mubr.f32.mxu0 0.0
  %1140 = vmatmul.mubr.f32.gmra.mrb[0].mxu0 %v930
  %v1141 = vpop.f32.mrb[0].mxu0
  %v1142 = vadd.f32 %v853, %v1141
  %v1143 = vpop.f32.mrb[0].mxu0
  %1144 = vmatprep.mubr.f32.mxu0 0.0
  %1145 = vmatmul.mubr.f32.gmra.mrb[0].mxu0 %v933
  %v1146 = vpop.f32.mrb[0].mxu0
  %v1147 = vadd.f32 %v853, %v1146
  %v1148 = vpop.f32.mrb[0].mxu0
  %1149 = vmatprep.mubr.f32.mxu0 0.0
  %1150 = vmatmul.mubr.f32.gmra.mrb[0].mxu0 %v936
  %v1151 = vpop.f32.mrb[0].mxu0
  %v1152 = vadd.f32 %v853, %v1151
  %v1153 = vpop.f32.mrb[0].mxu0
  %1154 = vmatprep.mubr.f32.mxu0 0.0
  %1155 = vmatmul.mubr.f32.gmra.mrb[0].mxu0 %v939
  %v1156 = vpop.f32.mrb[0].mxu0
  %v1157 = vadd.f32 %v853, %v1156
  %v1158 = vpop.f32.mrb[0].mxu0
  %1159 = vmatprep.mubr.f32.mxu0 0.0
  %1160 = vmatmul.mubr.f32.gmra.mrb[0].mxu0 %v942
  %v1161 = vpop.f32.mrb[0].mxu0
  %v1162 = vadd.f32 %v853, %v1161
  %v1163 = vpop.f32.mrb[0].mxu0
  %1164 = vmatprep.mubr.f32.mxu0 0.0
  %1165 = vmatmul.mubr.f32.gmra.mrb[0].mxu0 %v945
  %v1166 = vpop.f32.mrb[0].mxu0
  %v1167 = vadd.f32 %v853, %v1166
  %v1168 = vpop.f32.mrb[0].mxu0
  %1169 = vmatprep.mubr.f32.mxu0 0.0
  %1170 = vmatmul.mubr.f32.gmra.mrb[0].mxu0 %v948
  %v1171 = vpop.f32.mrb[0].mxu0
  %v1172 = vadd.f32 %v853, %v1171
  %v1173 = vpop.f32.mrb[0].mxu0
  %1174 = vdwg.mxu0
  %v1175 = vtanh.pop %v1017
  %v1176 = vtanh.pop %v1022
  %v1177 = vtanh.pop %v1027
  %v1178 = vtanh.pop %v1032
  %v1179 = vtanh.pop %v1037
  %v1180 = vtanh.pop %v1042
  %v1181 = vtanh.pop %v1047
  %v1182 = vtanh.pop %v1052
  %v1183 = vtanh.pop %v1057
  %v1184 = vtanh.pop %v1062
  %v1185 = vtanh.pop %v1067
  %v1186 = vtanh.pop %v1072
  %v1187 = vtanh.pop %v1077
  %v1188 = vtanh.pop %v1082
  %v1189 = vtanh.pop %v1087
  %v1190 = vtanh.pop %v1092
  %v1191 = vtanh.pop %v1097
  %v1192 = vtanh.pop %v1102
  %v1193 = vtanh.pop %v1107
  %v1194 = vtanh.pop %v1112
  %v1195 = vtanh.pop %v1117
  %v1196 = vtanh.pop %v1122
  %v1197 = vtanh.pop %v1127
  %v1198 = vtanh.pop %v1132
  %v1199 = vtanh.pop %v1137
  %v1200 = vtanh.pop %v1142
  %v1201 = vtanh.pop %v1147
  %v1202 = vtanh.pop %v1152
  %v1203 = vtanh.pop %v1157
  %v1204 = vtanh.pop %v1162
  %v1205 = vtanh.pop %v1167
  %v1206 = vtanh.pop %v1172
  %v1207 = vlaneseq
  %v1208 = vshrl.u32 %v1207, 7
  %v1209 = vsub.s32 0, %v1208
  %v1210 = vrot.slane %v849, %v1209
  %v1212 = vsel %vm486, %v1175, 0
  %v1215 = vsel %vm486, %v1176, 0
  %v1218 = vsel %vm486, %v1177, 0
  %v1221 = vsel %vm486, %v1178, 0
  %v1224 = vsel %vm486, %v1179, 0
  %v1227 = vsel %vm486, %v1180, 0
  %v1230 = vsel %vm486, %v1181, 0
  %v1233 = vsel %vm486, %v1182, 0
  %v1236 = vsel %vm486, %v1183, 0
  %v1239 = vsel %vm486, %v1184, 0
  %v1242 = vsel %vm486, %v1185, 0
  %v1245 = vsel %vm486, %v1186, 0
  %v1248 = vsel %vm486, %v1187, 0
  %v1251 = vsel %vm486, %v1188, 0
  %v1254 = vsel %vm486, %v1189, 0
  %v1257 = vsel %vm486, %v1190, 0
  %v1260 = vsel %vm486, %v1191, 0
  %v1263 = vsel %vm486, %v1192, 0
  %v1266 = vsel %vm486, %v1193, 0
  %v1269 = vsel %vm486, %v1194, 0
  %v1272 = vsel %vm486, %v1195, 0
  %v1275 = vsel %vm486, %v1196, 0
  %v1278 = vsel %vm486, %v1197, 0
  %v1281 = vsel %vm486, %v1198, 0
  %v1284 = vsel %vm486, %v1199, 0
  %v1287 = vsel %vm486, %v1200, 0
  %v1290 = vsel %vm486, %v1201, 0
  %v1293 = vsel %vm486, %v1202, 0
  %v1296 = vsel %vm486, %v1203, 0
  %v1299 = vsel %vm486, %v1204, 0
  %v1302 = vsel %vm486, %v1205, 0
  %v1305 = vsel %vm486, %v1206, 0
  %1307 = vmatprep.subr.mxu0 0.0
  %1308 = vmatpush1.msra.mxu0 %v844
  %1309 = vmatprep.subr.mxu0 0.0
  %1310 = vmatpush1.msra.mxu0 %v845
  %1311 = vmatprep.subr.mxu0 0.0
  %1312 = vmatpush1.msra.mxu0 %v846
  %1313 = vmatprep.subr.mxu0 0.0
  %1314 = vmatpush1.msra.mxu0 %v847
  %1315 = vmatprep.subr.mxu0 0.0
  %1316 = vmatpush1.msra.mxu0 0.0
  %1317 = vmatprep.subr.mxu0 0.0
  %1318 = vmatpush1.msra.mxu0 0.0
  %1319 = vmatprep.subr.mxu0 0.0
  %1320 = vmatpush1.msra.mxu0 0.0
  %1321 = vmatprep.subr.mxu0 0.0
  %1322 = vmatpush1.msra.mxu0 0.0
  %1323 = vmatprep.subr.mxu0 0.0
  %1324 = vmatpush1.msra.mxu0 0.0
  %1325 = vmatprep.subr.mxu0 0.0
  %1326 = vmatpush1.msra.mxu0 0.0
  %1327 = vmatprep.subr.mxu0 0.0
  %1328 = vmatpush1.msra.mxu0 0.0
  %1329 = vmatprep.subr.mxu0 0.0
  %1330 = vmatpush1.msra.mxu0 0.0
  %1331 = vmatprep.subr.mxu0 0.0
  %1332 = vmatpush1.msra.mxu0 0.0
  %1333 = vmatprep.subr.mxu0 0.0
  %1334 = vmatpush1.msra.mxu0 0.0
  %1335 = vmatprep.subr.mxu0 0.0
  %1336 = vmatpush1.msra.mxu0 0.0
  %1337 = vmatprep.subr.mxu0 0.0
  %1338 = vmatpush1.msra.mxu0 0.0
  %1339 = vmatprep.subr.mxu0 0.0
  %1340 = vmatpush1.msra.mxu0 0.0
  %1341 = vmatprep.subr.mxu0 0.0
  %1342 = vmatpush1.msra.mxu0 0.0
  %1343 = vmatprep.subr.mxu0 0.0
  %1344 = vmatpush1.msra.mxu0 0.0
  %1345 = vmatprep.subr.mxu0 0.0
  %1346 = vmatpush1.msra.mxu0 0.0
  %1347 = vmatprep.subr.mxu0 0.0
  %1348 = vmatpush1.msra.mxu0 0.0
  %1349 = vmatprep.subr.mxu0 0.0
  %1350 = vmatpush1.msra.mxu0 0.0
  %1351 = vmatprep.subr.mxu0 0.0
  %1352 = vmatpush1.msra.mxu0 0.0
  %1353 = vmatprep.subr.mxu0 0.0
  %1354 = vmatpush1.msra.mxu0 0.0
  %1355 = vmatprep.subr.mxu0 0.0
  %1356 = vmatpush1.msra.mxu0 0.0
  %1357 = vmatprep.subr.mxu0 0.0
  %1358 = vmatpush1.msra.mxu0 0.0
  %1359 = vmatprep.subr.mxu0 0.0
  %1360 = vmatpush1.msra.mxu0 0.0
  %1361 = vmatprep.subr.mxu0 0.0
  %1362 = vmatpush1.msra.mxu0 0.0
  %1363 = vmatprep.subr.mxu0 0.0
  %1364 = vmatpush1.msra.mxu0 0.0
  %1365 = vmatprep.subr.mxu0 0.0
  %1366 = vmatpush1.msra.mxu0 0.0
  %1367 = vmatprep.subr.mxu0 0.0
  %1368 = vmatpush1.msra.mxu0 0.0
  %1369 = vmatprep.subr.mxu0 0.0
  %1370 = vmatpush1.msra.mxu0 0.0
  %1371 = vmatprep.mubr.f32.mxu0 0.0
  %1372 = vmatmul.mubr.f32.gmra.mrb[0].mxu0 %v1212
  %v1373 = vpop.f32.mrb[0].mxu0
  %v1374 = vadd.f32 %v1210, %v1373
  %v1375 = vpop.f32.mrb[0].mxu0
  %1376 = vmatprep.mubr.f32.mxu0 0.0
  %1377 = vmatmul.mubr.f32.gmra.mrb[0].mxu0 %v1215
  %v1378 = vpop.f32.mrb[0].mxu0
  %v1379 = vadd.f32 %v1210, %v1378
  %v1380 = vpop.f32.mrb[0].mxu0
  %1381 = vmatprep.mubr.f32.mxu0 0.0
  %1382 = vmatmul.mubr.f32.gmra.mrb[0].mxu0 %v1218
  %v1383 = vpop.f32.mrb[0].mxu0
  %v1384 = vadd.f32 %v1210, %v1383
  %v1385 = vpop.f32.mrb[0].mxu0
  %1386 = vmatprep.mubr.f32.mxu0 0.0
  %1387 = vmatmul.mubr.f32.gmra.mrb[0].mxu0 %v1221
  %v1388 = vpop.f32.mrb[0].mxu0
  %v1389 = vadd.f32 %v1210, %v1388
  %v1390 = vpop.f32.mrb[0].mxu0
  %1391 = vmatprep.mubr.f32.mxu0 0.0
  %1392 = vmatmul.mubr.f32.gmra.mrb[0].mxu0 %v1224
  %v1393 = vpop.f32.mrb[0].mxu0
  %v1394 = vadd.f32 %v1210, %v1393
  %v1395 = vpop.f32.mrb[0].mxu0
  %1396 = vmatprep.mubr.f32.mxu0 0.0
  %1397 = vmatmul.mubr.f32.gmra.mrb[0].mxu0 %v1227
  %v1398 = vpop.f32.mrb[0].mxu0
  %v1399 = vadd.f32 %v1210, %v1398
  %v1400 = vpop.f32.mrb[0].mxu0
  %1401 = vmatprep.mubr.f32.mxu0 0.0
  %1402 = vmatmul.mubr.f32.gmra.mrb[0].mxu0 %v1230
  %v1403 = vpop.f32.mrb[0].mxu0
  %v1404 = vadd.f32 %v1210, %v1403
  %v1405 = vpop.f32.mrb[0].mxu0
  %1406 = vmatprep.mubr.f32.mxu0 0.0
  %1407 = vmatmul.mubr.f32.gmra.mrb[0].mxu0 %v1233
  %v1408 = vpop.f32.mrb[0].mxu0
  %v1409 = vadd.f32 %v1210, %v1408
  %v1410 = vpop.f32.mrb[0].mxu0
  %1411 = vmatprep.mubr.f32.mxu0 0.0
  %1412 = vmatmul.mubr.f32.gmra.mrb[0].mxu0 %v1236
  %v1413 = vpop.f32.mrb[0].mxu0
  %v1414 = vadd.f32 %v1210, %v1413
  %v1415 = vpop.f32.mrb[0].mxu0
  %1416 = vmatprep.mubr.f32.mxu0 0.0
  %1417 = vmatmul.mubr.f32.gmra.mrb[0].mxu0 %v1239
  %v1418 = vpop.f32.mrb[0].mxu0
  %v1419 = vadd.f32 %v1210, %v1418
  %v1420 = vpop.f32.mrb[0].mxu0
  %1421 = vmatprep.mubr.f32.mxu0 0.0
  %1422 = vmatmul.mubr.f32.gmra.mrb[0].mxu0 %v1242
  %v1423 = vpop.f32.mrb[0].mxu0
  %v1424 = vadd.f32 %v1210, %v1423
  %v1425 = vpop.f32.mrb[0].mxu0
  %1426 = vmatprep.mubr.f32.mxu0 0.0
  %1427 = vmatmul.mubr.f32.gmra.mrb[0].mxu0 %v1245
  %v1428 = vpop.f32.mrb[0].mxu0
  %v1429 = vadd.f32 %v1210, %v1428
  %v1430 = vpop.f32.mrb[0].mxu0
  %1431 = vmatprep.mubr.f32.mxu0 0.0
  %1432 = vmatmul.mubr.f32.gmra.mrb[0].mxu0 %v1248
  %v1433 = vpop.f32.mrb[0].mxu0
  %v1434 = vadd.f32 %v1210, %v1433
  %v1435 = vpop.f32.mrb[0].mxu0
  %1436 = vmatprep.mubr.f32.mxu0 0.0
  %1437 = vmatmul.mubr.f32.gmra.mrb[0].mxu0 %v1251
  %v1438 = vpop.f32.mrb[0].mxu0
  %v1439 = vadd.f32 %v1210, %v1438
  %v1440 = vpop.f32.mrb[0].mxu0
  %1441 = vmatprep.mubr.f32.mxu0 0.0
  %1442 = vmatmul.mubr.f32.gmra.mrb[0].mxu0 %v1254
  %v1443 = vpop.f32.mrb[0].mxu0
  %v1444 = vadd.f32 %v1210, %v1443
  %v1445 = vpop.f32.mrb[0].mxu0
  %1446 = vmatprep.mubr.f32.mxu0 0.0
  %1447 = vmatmul.mubr.f32.gmra.mrb[0].mxu0 %v1257
  %v1448 = vpop.f32.mrb[0].mxu0
  %v1449 = vadd.f32 %v1210, %v1448
  %v1450 = vpop.f32.mrb[0].mxu0
  %1451 = vmatprep.mubr.f32.mxu0 0.0
  %1452 = vmatmul.mubr.f32.gmra.mrb[0].mxu0 %v1260
  %v1453 = vpop.f32.mrb[0].mxu0
  %v1454 = vadd.f32 %v1210, %v1453
  %v1455 = vpop.f32.mrb[0].mxu0
  %1456 = vmatprep.mubr.f32.mxu0 0.0
  %1457 = vmatmul.mubr.f32.gmra.mrb[0].mxu0 %v1263
  %v1458 = vpop.f32.mrb[0].mxu0
  %v1459 = vadd.f32 %v1210, %v1458
  %v1460 = vpop.f32.mrb[0].mxu0
  %1461 = vmatprep.mubr.f32.mxu0 0.0
  %1462 = vmatmul.mubr.f32.gmra.mrb[0].mxu0 %v1266
  %v1463 = vpop.f32.mrb[0].mxu0
  %v1464 = vadd.f32 %v1210, %v1463
  %v1465 = vpop.f32.mrb[0].mxu0
  %1466 = vmatprep.mubr.f32.mxu0 0.0
  %1467 = vmatmul.mubr.f32.gmra.mrb[0].mxu0 %v1269
  %v1468 = vpop.f32.mrb[0].mxu0
  %v1469 = vadd.f32 %v1210, %v1468
  %v1470 = vpop.f32.mrb[0].mxu0
  %1471 = vmatprep.mubr.f32.mxu0 0.0
  %1472 = vmatmul.mubr.f32.gmra.mrb[0].mxu0 %v1272
  %v1473 = vpop.f32.mrb[0].mxu0
  %v1474 = vadd.f32 %v1210, %v1473
  %v1475 = vpop.f32.mrb[0].mxu0
  %1476 = vmatprep.mubr.f32.mxu0 0.0
  %1477 = vmatmul.mubr.f32.gmra.mrb[0].mxu0 %v1275
  %v1478 = vpop.f32.mrb[0].mxu0
  %v1479 = vadd.f32 %v1210, %v1478
  %v1480 = vpop.f32.mrb[0].mxu0
  %1481 = vmatprep.mubr.f32.mxu0 0.0
  %1482 = vmatmul.mubr.f32.gmra.mrb[0].mxu0 %v1278
  %v1483 = vpop.f32.mrb[0].mxu0
  %v1484 = vadd.f32 %v1210, %v1483
  %v1485 = vpop.f32.mrb[0].mxu0
  %1486 = vmatprep.mubr.f32.mxu0 0.0
  %1487 = vmatmul.mubr.f32.gmra.mrb[0].mxu0 %v1281
  %v1488 = vpop.f32.mrb[0].mxu0
  %v1489 = vadd.f32 %v1210, %v1488
  %v1490 = vpop.f32.mrb[0].mxu0
  %1491 = vmatprep.mubr.f32.mxu0 0.0
  %1492 = vmatmul.mubr.f32.gmra.mrb[0].mxu0 %v1284
  %v1493 = vpop.f32.mrb[0].mxu0
  %v1494 = vadd.f32 %v1210, %v1493
  %v1495 = vpop.f32.mrb[0].mxu0
  %1496 = vmatprep.mubr.f32.mxu0 0.0
  %1497 = vmatmul.mubr.f32.gmra.mrb[0].mxu0 %v1287
  %v1498 = vpop.f32.mrb[0].mxu0
  %v1499 = vadd.f32 %v1210, %v1498
  %v1500 = vpop.f32.mrb[0].mxu0
  %1501 = vmatprep.mubr.f32.mxu0 0.0
  %1502 = vmatmul.mubr.f32.gmra.mrb[0].mxu0 %v1290
  %v1503 = vpop.f32.mrb[0].mxu0
  %v1504 = vadd.f32 %v1210, %v1503
  %v1505 = vpop.f32.mrb[0].mxu0
  %1506 = vmatprep.mubr.f32.mxu0 0.0
  %1507 = vmatmul.mubr.f32.gmra.mrb[0].mxu0 %v1293
  %v1508 = vpop.f32.mrb[0].mxu0
  %v1509 = vadd.f32 %v1210, %v1508
  %v1510 = vpop.f32.mrb[0].mxu0
  %1511 = vmatprep.mubr.f32.mxu0 0.0
  %1512 = vmatmul.mubr.f32.gmra.mrb[0].mxu0 %v1296
  %v1513 = vpop.f32.mrb[0].mxu0
  %v1514 = vadd.f32 %v1210, %v1513
  %v1515 = vpop.f32.mrb[0].mxu0
  %1516 = vmatprep.mubr.f32.mxu0 0.0
  %1517 = vmatmul.mubr.f32.gmra.mrb[0].mxu0 %v1299
  %v1518 = vpop.f32.mrb[0].mxu0
  %v1519 = vadd.f32 %v1210, %v1518
  %v1520 = vpop.f32.mrb[0].mxu0
  %1521 = vmatprep.mubr.f32.mxu0 0.0
  %1522 = vmatmul.mubr.f32.gmra.mrb[0].mxu0 %v1302
  %v1523 = vpop.f32.mrb[0].mxu0
  %v1524 = vadd.f32 %v1210, %v1523
  %v1525 = vpop.f32.mrb[0].mxu0
  %1526 = vmatprep.mubr.f32.mxu0 0.0
  %1527 = vmatmul.mubr.f32.gmra.mrb[0].mxu0 %v1305
  %v1528 = vpop.f32.mrb[0].mxu0
  %v1529 = vadd.f32 %v1210, %v1528
  %v1530 = vpop.f32.mrb[0].mxu0
  %1531 = vdwg.mxu0
  %1564 = vrot.lane.b32.xlu0 %v1374, 16
  %v1565 = vpop.permute.xlu0 %1564
  %1566 = vrot.lane.b32.xlu0 %v1379, 16
  %v1567 = vpop.permute.xlu0 %1566
  %1568 = vrot.lane.b32.xlu0 %v1384, 16
  %v1569 = vpop.permute.xlu0 %1568
  %1570 = vrot.lane.b32.xlu0 %v1389, 16
  %v1571 = vpop.permute.xlu0 %1570
  %1572 = vrot.lane.b32.xlu0 %v1394, 16
  %v1573 = vpop.permute.xlu0 %1572
  %1574 = vrot.lane.b32.xlu0 %v1399, 16
  %v1575 = vpop.permute.xlu0 %1574
  %1576 = vrot.lane.b32.xlu0 %v1404, 16
  %v1577 = vpop.permute.xlu0 %1576
  %1578 = vrot.lane.b32.xlu0 %v1409, 16
  %v1579 = vpop.permute.xlu0 %1578
  %1580 = vrot.lane.b32.xlu0 %v1414, 16
  %v1581 = vpop.permute.xlu0 %1580
  %1582 = vrot.lane.b32.xlu0 %v1419, 16
  %v1583 = vpop.permute.xlu0 %1582
  %1584 = vrot.lane.b32.xlu0 %v1424, 16
  %v1585 = vpop.permute.xlu0 %1584
  %1586 = vrot.lane.b32.xlu0 %v1429, 16
  %v1587 = vpop.permute.xlu0 %1586
  %1588 = vrot.lane.b32.xlu0 %v1434, 16
  %v1589 = vpop.permute.xlu0 %1588
  %1590 = vrot.lane.b32.xlu0 %v1439, 16
  %v1591 = vpop.permute.xlu0 %1590
  %1592 = vrot.lane.b32.xlu0 %v1444, 16
  %v1593 = vpop.permute.xlu0 %1592
  %1594 = vrot.lane.b32.xlu0 %v1449, 16
  %v1595 = vpop.permute.xlu0 %1594
  %1596 = vrot.lane.b32.xlu0 %v1454, 16
  %v1597 = vpop.permute.xlu0 %1596
  %1598 = vrot.lane.b32.xlu0 %v1459, 16
  %v1599 = vpop.permute.xlu0 %1598
  %1600 = vrot.lane.b32.xlu0 %v1464, 16
  %v1601 = vpop.permute.xlu0 %1600
  %1602 = vrot.lane.b32.xlu0 %v1469, 16
  %v1603 = vpop.permute.xlu0 %1602
  %1604 = vrot.lane.b32.xlu0 %v1474, 16
  %v1605 = vpop.permute.xlu0 %1604
  %1606 = vrot.lane.b32.xlu0 %v1479, 16
  %v1607 = vpop.permute.xlu0 %1606
  %1608 = vrot.lane.b32.xlu0 %v1484, 16
  %v1609 = vpop.permute.xlu0 %1608
  %1610 = vrot.lane.b32.xlu0 %v1489, 16
  %v1611 = vpop.permute.xlu0 %1610
  %1612 = vrot.lane.b32.xlu0 %v1494, 16
  %v1613 = vpop.permute.xlu0 %1612
  %1614 = vrot.lane.b32.xlu0 %v1499, 16
  %v1615 = vpop.permute.xlu0 %1614
  %1616 = vrot.lane.b32.xlu0 %v1504, 16
  %v1617 = vpop.permute.xlu0 %1616
  %1618 = vrot.lane.b32.xlu0 %v1509, 16
  %v1619 = vpop.permute.xlu0 %1618
  %1620 = vrot.lane.b32.xlu0 %v1514, 16
  %v1621 = vpop.permute.xlu0 %1620
  %1622 = vrot.lane.b32.xlu0 %v1519, 16
  %v1623 = vpop.permute.xlu0 %1622
  %1624 = vrot.lane.b32.xlu0 %v1524, 16
  %v1625 = vpop.permute.xlu0 %1624
  %1626 = vrot.lane.b32.xlu0 %v1529, 16
  %v1627 = vpop.permute.xlu0 %1626
  %v1660 = vadd.f32 %v20, %v1565
  %v1661 = vadd.f32 %v21, %v1567
  %v1662 = vadd.f32 %v22, %v1569
  %v1663 = vadd.f32 %v23, %v1571
  %v1664 = vadd.f32 %v24, %v1573
  %v1665 = vadd.f32 %v25, %v1575
  %v1666 = vadd.f32 %v26, %v1577
  %v1667 = vadd.f32 %v27, %v1579
  %v1668 = vadd.f32 %v28, %v1581
  %v1669 = vadd.f32 %v29, %v1583
  %v1670 = vadd.f32 %v30, %v1585
  %v1671 = vadd.f32 %v31, %v1587
  %v1672 = vadd.f32 %v32, %v1589
  %v1673 = vadd.f32 %v33, %v1591
  %v1674 = vadd.f32 %v34, %v1593
  %v1675 = vadd.f32 %v35, %v1595
  %v1676 = vadd.f32 %v36, %v1597
  %v1677 = vadd.f32 %v37, %v1599
  %v1678 = vadd.f32 %v38, %v1601
  %v1679 = vadd.f32 %v39, %v1603
  %v1680 = vadd.f32 %v40, %v1605
  %v1681 = vadd.f32 %v41, %v1607
  %v1682 = vadd.f32 %v42, %v1609
  %v1683 = vadd.f32 %v43, %v1611
  %v1684 = vadd.f32 %v44, %v1613
  %v1685 = vadd.f32 %v45, %v1615
  %v1686 = vadd.f32 %v46, %v1617
  %v1687 = vadd.f32 %v47, %v1619
  %v1688 = vadd.f32 %v48, %v1621
  %v1689 = vadd.f32 %v49, %v1623
  %v1690 = vadd.f32 %v50, %v1625
  %v1691 = vadd.f32 %v51, %v1627
  %s1692 = scalar_lea.vmem %s1, 32
  %v1693 = vld [vmem:[%s1692] sm:$0xff]
  %v1694 = vld [vmem:[%s1692 + $0x8] sm:$0xff]
  %s1695 = scalar_lea.vmem %s3, 64
  %v1696 = vld [vmem:[%s1695] sm:$0xff]
  %v1697 = vld [vmem:[%s1695 + $0x8] sm:$0xff]
  %v1698 = vld [vmem:[%s1695 + $0x10] sm:$0xff]
  %v1699 = vld [vmem:[%s1695 + $0x18] sm:$0xff]
  %v1700 = vld [vmem:[%s2 + $0x2] sm:$0x1]
  %v1701 = vld [vmem:[%s4 + $0x2] sm:$0x1]
  %v1702 = vlaneseq
  %v1703 = vshrl.u32 %v1702, 7
  %v1704 = vsub.s32 0, %v1703
  %v1705 = vrot.slane %v1700, %v1704
  %1738 = vrot.lane.b32.xlu0 %v1660, 112
  %v1739 = vpop.permute.xlu0 %1738
  %1740 = vrot.lane.b32.xlu0 %v1661, 112
  %v1741 = vpop.permute.xlu0 %1740
  %1742 = vrot.lane.b32.xlu0 %v1662, 112
  %v1743 = vpop.permute.xlu0 %1742
  %1744 = vrot.lane.b32.xlu0 %v1663, 112
  %v1745 = vpop.permute.xlu0 %1744
  %1746 = vrot.lane.b32.xlu0 %v1664, 112
  %v1747 = vpop.permute.xlu0 %1746
  %1748 = vrot.lane.b32.xlu0 %v1665, 112
  %v1749 = vpop.permute.xlu0 %1748
  %1750 = vrot.lane.b32.xlu0 %v1666, 112
  %v1751 = vpop.permute.xlu0 %1750
  %1752 = vrot.lane.b32.xlu0 %v1667, 112
  %v1753 = vpop.permute.xlu0 %1752
  %1754 = vrot.lane.b32.xlu0 %v1668, 112
  %v1755 = vpop.permute.xlu0 %1754
  %1756 = vrot.lane.b32.xlu0 %v1669, 112
  %v1757 = vpop.permute.xlu0 %1756
  %1758 = vrot.lane.b32.xlu0 %v1670, 112
  %v1759 = vpop.permute.xlu0 %1758
  %1760 = vrot.lane.b32.xlu0 %v1671, 112
  %v1761 = vpop.permute.xlu0 %1760
  %1762 = vrot.lane.b32.xlu0 %v1672, 112
  %v1763 = vpop.permute.xlu0 %1762
  %1764 = vrot.lane.b32.xlu0 %v1673, 112
  %v1765 = vpop.permute.xlu0 %1764
  %1766 = vrot.lane.b32.xlu0 %v1674, 112
  %v1767 = vpop.permute.xlu0 %1766
  %1768 = vrot.lane.b32.xlu0 %v1675, 112
  %v1769 = vpop.permute.xlu0 %1768
  %1770 = vrot.lane.b32.xlu0 %v1676, 112
  %v1771 = vpop.permute.xlu0 %1770
  %1772 = vrot.lane.b32.xlu0 %v1677, 112
  %v1773 = vpop.permute.xlu0 %1772
  %1774 = vrot.lane.b32.xlu0 %v1678, 112
  %v1775 = vpop.permute.xlu0 %1774
  %1776 = vrot.lane.b32.xlu0 %v1679, 112
  %v1777 = vpop.permute.xlu0 %1776
  %1778 = vrot.lane.b32.xlu0 %v1680, 112
  %v1779 = vpop.permute.xlu0 %1778
  %1780 = vrot.lane.b32.xlu0 %v1681, 112
  %v1781 = vpop.permute.xlu0 %1780
  %1782 = vrot.lane.b32.xlu0 %v1682, 112
  %v1783 = vpop.permute.xlu0 %1782
  %1784 = vrot.lane.b32.xlu0 %v1683, 112
  %v1785 = vpop.permute.xlu0 %1784
  %1786 = vrot.lane.b32.xlu0 %v1684, 112
  %v1787 = vpop.permute.xlu0 %1786
  %1788 = vrot.lane.b32.xlu0 %v1685, 112
  %v1789 = vpop.permute.xlu0 %1788
  %1790 = vrot.lane.b32.xlu0 %v1686, 112
  %v1791 = vpop.permute.xlu0 %1790
  %1792 = vrot.lane.b32.xlu0 %v1687, 112
  %v1793 = vpop.permute.xlu0 %1792
  %1794 = vrot.lane.b32.xlu0 %v1688, 112
  %v1795 = vpop.permute.xlu0 %1794
  %1796 = vrot.lane.b32.xlu0 %v1689, 112
  %v1797 = vpop.permute.xlu0 %1796
  %1798 = vrot.lane.b32.xlu0 %v1690, 112
  %v1799 = vpop.permute.xlu0 %1798
  %1800 = vrot.lane.b32.xlu0 %v1691, 112
  %v1801 = vpop.permute.xlu0 %1800
  %v1802 = vsel %vm160, %v1739, 0
  %v1804 = vsel %vm160, %v1741, 0
  %v1806 = vsel %vm160, %v1743, 0
  %v1808 = vsel %vm160, %v1745, 0
  %v1810 = vsel %vm160, %v1747, 0
  %v1812 = vsel %vm160, %v1749, 0
  %v1814 = vsel %vm160, %v1751, 0
  %v1816 = vsel %vm160, %v1753, 0
  %v1818 = vsel %vm160, %v1755, 0
  %v1820 = vsel %vm160, %v1757, 0
  %v1822 = vsel %vm160, %v1759, 0
  %v1824 = vsel %vm160, %v1761, 0
  %v1826 = vsel %vm160, %v1763, 0
  %v1828 = vsel %vm160, %v1765, 0
  %v1830 = vsel %vm160, %v1767, 0
  %v1832 = vsel %vm160, %v1769, 0
  %v1834 = vsel %vm160, %v1771, 0
  %v1836 = vsel %vm160, %v1773, 0
  %v1838 = vsel %vm160, %v1775, 0
  %v1840 = vsel %vm160, %v1777, 0
  %v1842 = vsel %vm160, %v1779, 0
  %v1844 = vsel %vm160, %v1781, 0
  %v1846 = vsel %vm160, %v1783, 0
  %v1848 = vsel %vm160, %v1785, 0
  %v1850 = vsel %vm160, %v1787, 0
  %v1852 = vsel %vm160, %v1789, 0
  %v1854 = vsel %vm160, %v1791, 0
  %v1856 = vsel %vm160, %v1793, 0
  %v1858 = vsel %vm160, %v1795, 0
  %v1860 = vsel %vm160, %v1797, 0
  %v1862 = vsel %vm160, %v1799, 0
  %v1864 = vsel %vm160, %v1801, 0
  %1866 = vmatprep.subr.mxu0 0.0
  %1867 = vmatpush1.msra.mxu0 %v1693
  %1868 = vmatprep.subr.mxu0 0.0
  %1869 = vmatpush1.msra.mxu0 %v1694
  %1870 = vmatprep.subr.mxu0 0.0
  %1871 = vmatpush1.msra.mxu0 0.0
  %1872 = vmatprep.subr.mxu0 0.0
  %1873 = vmatpush1.msra.mxu0 0.0
  %1874 = vmatprep.subr.mxu0 0.0
  %1875 = vmatpush1.msra.mxu0 0.0
  %1876 = vmatprep.subr.mxu0 0.0
  %1877 = vmatpush1.msra.mxu0 0.0
  %1878 = vmatprep.subr.mxu0 0.0
  %1879 = vmatpush1.msra.mxu0 0.0
  %1880 = vmatprep.subr.mxu0 0.0
  %1881 = vmatpush1.msra.mxu0 0.0
  %1882 = vmatprep.subr.mxu0 0.0
  %1883 = vmatpush1.msra.mxu0 0.0
  %1884 = vmatprep.subr.mxu0 0.0
  %1885 = vmatpush1.msra.mxu0 0.0
  %1886 = vmatprep.subr.mxu0 0.0
  %1887 = vmatpush1.msra.mxu0 0.0
  %1888 = vmatprep.subr.mxu0 0.0
  %1889 = vmatpush1.msra.mxu0 0.0
  %1890 = vmatprep.subr.mxu0 0.0
  %1891 = vmatpush1.msra.mxu0 0.0
  %1892 = vmatprep.subr.mxu0 0.0
  %1893 = vmatpush1.msra.mxu0 0.0
  %1894 = vmatprep.subr.mxu0 0.0
  %1895 = vmatpush1.msra.mxu0 0.0
  %1896 = vmatprep.subr.mxu0 0.0
  %1897 = vmatpush1.msra.mxu0 0.0
  %1898 = vmatprep.subr.mxu0 0.0
  %1899 = vmatpush1.msra.mxu0 0.0
  %1900 = vmatprep.subr.mxu0 0.0
  %1901 = vmatpush1.msra.mxu0 0.0
  %1902 = vmatprep.subr.mxu0 0.0
  %1903 = vmatpush1.msra.mxu0 0.0
  %1904 = vmatprep.subr.mxu0 0.0
  %1905 = vmatpush1.msra.mxu0 0.0
  %1906 = vmatprep.subr.mxu0 0.0
  %1907 = vmatpush1.msra.mxu0 0.0
  %1908 = vmatprep.subr.mxu0 0.0
  %1909 = vmatpush1.msra.mxu0 0.0
  %1910 = vmatprep.subr.mxu0 0.0
  %1911 = vmatpush1.msra.mxu0 0.0
  %1912 = vmatprep.subr.mxu0 0.0
  %1913 = vmatpush1.msra.mxu0 0.0
  %1914 = vmatprep.subr.mxu0 0.0
  %1915 = vmatpush1.msra.mxu0 0.0
  %1916 = vmatprep.subr.mxu0 0.0
  %1917 = vmatpush1.msra.mxu0 0.0
  %1918 = vmatprep.subr.mxu0 0.0
  %1919 = vmatpush1.msra.mxu0 0.0
  %1920 = vmatprep.subr.mxu0 0.0
  %1921 = vmatpush1.msra.mxu0 0.0
  %1922 = vmatprep.subr.mxu0 0.0
  %1923 = vmatpush1.msra.mxu0 0.0
  %1924 = vmatprep.subr.mxu0 0.0
  %1925 = vmatpush1.msra.mxu0 0.0
  %1926 = vmatprep.subr.mxu0 0.0
  %1927 = vmatpush1.msra.mxu0 0.0
  %1928 = vmatprep.subr.mxu0 0.0
  %1929 = vmatpush1.msra.mxu0 0.0
  %1930 = vmatprep.mubr.f32.mxu0 0.0
  %1931 = vmatmul.mubr.f32.gmra.mrb[0].mxu0 %v1802
  %v1932 = vpop.f32.mrb[0].mxu0
  %v1933 = vadd.f32 %v1705, %v1932
  %v1934 = vpop.f32.mrb[0].mxu0
  %1935 = vmatprep.mubr.f32.mxu0 0.0
  %1936 = vmatmul.mubr.f32.gmra.mrb[0].mxu0 %v1804
  %v1937 = vpop.f32.mrb[0].mxu0
  %v1938 = vadd.f32 %v1705, %v1937
  %v1939 = vpop.f32.mrb[0].mxu0
  %1940 = vmatprep.mubr.f32.mxu0 0.0
  %1941 = vmatmul.mubr.f32.gmra.mrb[0].mxu0 %v1806
  %v1942 = vpop.f32.mrb[0].mxu0
  %v1943 = vadd.f32 %v1705, %v1942
  %v1944 = vpop.f32.mrb[0].mxu0
  %1945 = vmatprep.mubr.f32.mxu0 0.0
  %1946 = vmatmul.mubr.f32.gmra.mrb[0].mxu0 %v1808
  %v1947 = vpop.f32.mrb[0].mxu0
  %v1948 = vadd.f32 %v1705, %v1947
  %v1949 = vpop.f32.mrb[0].mxu0
  %1950 = vmatprep.mubr.f32.mxu0 0.0
  %1951 = vmatmul.mubr.f32.gmra.mrb[0].mxu0 %v1810
  %v1952 = vpop.f32.mrb[0].mxu0
  %v1953 = vadd.f32 %v1705, %v1952
  %v1954 = vpop.f32.mrb[0].mxu0
  %1955 = vmatprep.mubr.f32.mxu0 0.0
  %1956 = vmatmul.mubr.f32.gmra.mrb[0].mxu0 %v1812
  %v1957 = vpop.f32.mrb[0].mxu0
  %v1958 = vadd.f32 %v1705, %v1957
  %v1959 = vpop.f32.mrb[0].mxu0
  %1960 = vmatprep.mubr.f32.mxu0 0.0
  %1961 = vmatmul.mubr.f32.gmra.mrb[0].mxu0 %v1814
  %v1962 = vpop.f32.mrb[0].mxu0
  %v1963 = vadd.f32 %v1705, %v1962
  %v1964 = vpop.f32.mrb[0].mxu0
  %1965 = vmatprep.mubr.f32.mxu0 0.0
  %1966 = vmatmul.mubr.f32.gmra.mrb[0].mxu0 %v1816
  %v1967 = vpop.f32.mrb[0].mxu0
  %v1968 = vadd.f32 %v1705, %v1967
  %v1969 = vpop.f32.mrb[0].mxu0
  %1970 = vmatprep.mubr.f32.mxu0 0.0
  %1971 = vmatmul.mubr.f32.gmra.mrb[0].mxu0 %v1818
  %v1972 = vpop.f32.mrb[0].mxu0
  %v1973 = vadd.f32 %v1705, %v1972
  %v1974 = vpop.f32.mrb[0].mxu0
  %1975 = vmatprep.mubr.f32.mxu0 0.0
  %1976 = vmatmul.mubr.f32.gmra.mrb[0].mxu0 %v1820
  %v1977 = vpop.f32.mrb[0].mxu0
  %v1978 = vadd.f32 %v1705, %v1977
  %v1979 = vpop.f32.mrb[0].mxu0
  %1980 = vmatprep.mubr.f32.mxu0 0.0
  %1981 = vmatmul.mubr.f32.gmra.mrb[0].mxu0 %v1822
  %v1982 = vpop.f32.mrb[0].mxu0
  %v1983 = vadd.f32 %v1705, %v1982
  %v1984 = vpop.f32.mrb[0].mxu0
  %1985 = vmatprep.mubr.f32.mxu0 0.0
  %1986 = vmatmul.mubr.f32.gmra.mrb[0].mxu0 %v1824
  %v1987 = vpop.f32.mrb[0].mxu0
  %v1988 = vadd.f32 %v1705, %v1987
  %v1989 = vpop.f32.mrb[0].mxu0
  %1990 = vmatprep.mubr.f32.mxu0 0.0
  %1991 = vmatmul.mubr.f32.gmra.mrb[0].mxu0 %v1826
  %v1992 = vpop.f32.mrb[0].mxu0
  %v1993 = vadd.f32 %v1705, %v1992
  %v1994 = vpop.f32.mrb[0].mxu0
  %1995 = vmatprep.mubr.f32.mxu0 0.0
  %1996 = vmatmul.mubr.f32.gmra.mrb[0].mxu0 %v1828
  %v1997 = vpop.f32.mrb[0].mxu0
  %v1998 = vadd.f32 %v1705, %v1997
  %v1999 = vpop.f32.mrb[0].mxu0
  %2000 = vmatprep.mubr.f32.mxu0 0.0
  %2001 = vmatmul.mubr.f32.gmra.mrb[0].mxu0 %v1830
  %v2002 = vpop.f32.mrb[0].mxu0
  %v2003 = vadd.f32 %v1705, %v2002
  %v2004 = vpop.f32.mrb[0].mxu0
  %2005 = vmatprep.mubr.f32.mxu0 0.0
  %2006 = vmatmul.mubr.f32.gmra.mrb[0].mxu0 %v1832
  %v2007 = vpop.f32.mrb[0].mxu0
  %v2008 = vadd.f32 %v1705, %v2007
  %v2009 = vpop.f32.mrb[0].mxu0
  %2010 = vmatprep.mubr.f32.mxu0 0.0
  %2011 = vmatmul.mubr.f32.gmra.mrb[0].mxu0 %v1834
  %v2012 = vpop.f32.mrb[0].mxu0
  %v2013 = vadd.f32 %v1705, %v2012
  %v2014 = vpop.f32.mrb[0].mxu0
  %2015 = vmatprep.mubr.f32.mxu0 0.0
  %2016 = vmatmul.mubr.f32.gmra.mrb[0].mxu0 %v1836
  %v2017 = vpop.f32.mrb[0].mxu0
  %v2018 = vadd.f32 %v1705, %v2017
  %v2019 = vpop.f32.mrb[0].mxu0
  %2020 = vmatprep.mubr.f32.mxu0 0.0
  %2021 = vmatmul.mubr.f32.gmra.mrb[0].mxu0 %v1838
  %v2022 = vpop.f32.mrb[0].mxu0
  %v2023 = vadd.f32 %v1705, %v2022
  %v2024 = vpop.f32.mrb[0].mxu0
  %2025 = vmatprep.mubr.f32.mxu0 0.0
  %2026 = vmatmul.mubr.f32.gmra.mrb[0].mxu0 %v1840
  %v2027 = vpop.f32.mrb[0].mxu0
  %v2028 = vadd.f32 %v1705, %v2027
  %v2029 = vpop.f32.mrb[0].mxu0
  %2030 = vmatprep.mubr.f32.mxu0 0.0
  %2031 = vmatmul.mubr.f32.gmra.mrb[0].mxu0 %v1842
  %v2032 = vpop.f32.mrb[0].mxu0
  %v2033 = vadd.f32 %v1705, %v2032
  %v2034 = vpop.f32.mrb[0].mxu0
  %2035 = vmatprep.mubr.f32.mxu0 0.0
  %2036 = vmatmul.mubr.f32.gmra.mrb[0].mxu0 %v1844
  %v2037 = vpop.f32.mrb[0].mxu0
  %v2038 = vadd.f32 %v1705, %v2037
  %v2039 = vpop.f32.mrb[0].mxu0
  %2040 = vmatprep.mubr.f32.mxu0 0.0
  %2041 = vmatmul.mubr.f32.gmra.mrb[0].mxu0 %v1846
  %v2042 = vpop.f32.mrb[0].mxu0
  %v2043 = vadd.f32 %v1705, %v2042
  %v2044 = vpop.f32.mrb[0].mxu0
  %2045 = vmatprep.mubr.f32.mxu0 0.0
  %2046 = vmatmul.mubr.f32.gmra.mrb[0].mxu0 %v1848
  %v2047 = vpop.f32.mrb[0].mxu0
  %v2048 = vadd.f32 %v1705, %v2047
  %v2049 = vpop.f32.mrb[0].mxu0
  %2050 = vmatprep.mubr.f32.mxu0 0.0
  %2051 = vmatmul.mubr.f32.gmra.mrb[0].mxu0 %v1850
  %v2052 = vpop.f32.mrb[0].mxu0
  %v2053 = vadd.f32 %v1705, %v2052
  %v2054 = vpop.f32.mrb[0].mxu0
  %2055 = vmatprep.mubr.f32.mxu0 0.0
  %2056 = vmatmul.mubr.f32.gmra.mrb[0].mxu0 %v1852
  %v2057 = vpop.f32.mrb[0].mxu0
  %v2058 = vadd.f32 %v1705, %v2057
  %v2059 = vpop.f32.mrb[0].mxu0
  %2060 = vmatprep.mubr.f32.mxu0 0.0
  %2061 = vmatmul.mubr.f32.gmra.mrb[0].mxu0 %v1854
  %v2062 = vpop.f32.mrb[0].mxu0
  %v2063 = vadd.f32 %v1705, %v2062
  %v2064 = vpop.f32.mrb[0].mxu0
  %2065 = vmatprep.mubr.f32.mxu0 0.0
  %2066 = vmatmul.mubr.f32.gmra.mrb[0].mxu0 %v1856
  %v2067 = vpop.f32.mrb[0].mxu0
  %v2068 = vadd.f32 %v1705, %v2067
  %v2069 = vpop.f32.mrb[0].mxu0
  %2070 = vmatprep.mubr.f32.mxu0 0.0
  %2071 = vmatmul.mubr.f32.gmra.mrb[0].mxu0 %v1858
  %v2072 = vpop.f32.mrb[0].mxu0
  %v2073 = vadd.f32 %v1705, %v2072
  %v2074 = vpop.f32.mrb[0].mxu0
  %2075 = vmatprep.mubr.f32.mxu0 0.0
  %2076 = vmatmul.mubr.f32.gmra.mrb[0].mxu0 %v1860
  %v2077 = vpop.f32.mrb[0].mxu0
  %v2078 = vadd.f32 %v1705, %v2077
  %v2079 = vpop.f32.mrb[0].mxu0
  %2080 = vmatprep.mubr.f32.mxu0 0.0
  %2081 = vmatmul.mubr.f32.gmra.mrb[0].mxu0 %v1862
  %v2082 = vpop.f32.mrb[0].mxu0
  %v2083 = vadd.f32 %v1705, %v2082
  %v2084 = vpop.f32.mrb[0].mxu0
  %2085 = vmatprep.mubr.f32.mxu0 0.0
  %2086 = vmatmul.mubr.f32.gmra.mrb[0].mxu0 %v1864
  %v2087 = vpop.f32.mrb[0].mxu0
  %v2088 = vadd.f32 %v1705, %v2087
  %v2089 = vpop.f32.mrb[0].mxu0
  %2090 = vdwg.mxu0
  %v2091 = vtanh.pop %v1933
  %v2092 = vtanh.pop %v1938
  %v2093 = vtanh.pop %v1943
  %v2094 = vtanh.pop %v1948
  %v2095 = vtanh.pop %v1953
  %v2096 = vtanh.pop %v1958
  %v2097 = vtanh.pop %v1963
  %v2098 = vtanh.pop %v1968
  %v2099 = vtanh.pop %v1973
  %v2100 = vtanh.pop %v1978
  %v2101 = vtanh.pop %v1983
  %v2102 = vtanh.pop %v1988
  %v2103 = vtanh.pop %v1993
  %v2104 = vtanh.pop %v1998
  %v2105 = vtanh.pop %v2003
  %v2106 = vtanh.pop %v2008
  %v2107 = vtanh.pop %v2013
  %v2108 = vtanh.pop %v2018
  %v2109 = vtanh.pop %v2023
  %v2110 = vtanh.pop %v2028
  %v2111 = vtanh.pop %v2033
  %v2112 = vtanh.pop %v2038
  %v2113 = vtanh.pop %v2043
  %v2114 = vtanh.pop %v2048
  %v2115 = vtanh.pop %v2053
  %v2116 = vtanh.pop %v2058
  %v2117 = vtanh.pop %v2063
  %v2118 = vtanh.pop %v2068
  %v2119 = vtanh.pop %v2073
  %v2120 = vtanh.pop %v2078
  %v2121 = vtanh.pop %v2083
  %v2122 = vtanh.pop %v2088
  %v2123 = vlaneseq
  %v2124 = vshrl.u32 %v2123, 7
  %v2125 = vsub.s32 0, %v2124
  %v2126 = vrot.slane %v1701, %v2125
  %v2128 = vsel %vm486, %v2091, 0
  %v2131 = vsel %vm486, %v2092, 0
  %v2134 = vsel %vm486, %v2093, 0
  %v2137 = vsel %vm486, %v2094, 0
  %v2140 = vsel %vm486, %v2095, 0
  %v2143 = vsel %vm486, %v2096, 0
  %v2146 = vsel %vm486, %v2097, 0
  %v2149 = vsel %vm486, %v2098, 0
  %v2152 = vsel %vm486, %v2099, 0
  %v2155 = vsel %vm486, %v2100, 0
  %v2158 = vsel %vm486, %v2101, 0
  %v2161 = vsel %vm486, %v2102, 0
  %v2164 = vsel %vm486, %v2103, 0
  %v2167 = vsel %vm486, %v2104, 0
  %v2170 = vsel %vm486, %v2105, 0
  %v2173 = vsel %vm486, %v2106, 0
  %v2176 = vsel %vm486, %v2107, 0
  %v2179 = vsel %vm486, %v2108, 0
  %v2182 = vsel %vm486, %v2109, 0
  %v2185 = vsel %vm486, %v2110, 0
  %v2188 = vsel %vm486, %v2111, 0
  %v2191 = vsel %vm486, %v2112, 0
  %v2194 = vsel %vm486, %v2113, 0
  %v2197 = vsel %vm486, %v2114, 0
  %v2200 = vsel %vm486, %v2115, 0
  %v2203 = vsel %vm486, %v2116, 0
  %v2206 = vsel %vm486, %v2117, 0
  %v2209 = vsel %vm486, %v2118, 0
  %v2212 = vsel %vm486, %v2119, 0
  %v2215 = vsel %vm486, %v2120, 0
  %v2218 = vsel %vm486, %v2121, 0
  %v2221 = vsel %vm486, %v2122, 0
  %2223 = vmatprep.subr.mxu0 0.0
  %2224 = vmatpush1.msra.mxu0 %v1696
  %2225 = vmatprep.subr.mxu0 0.0
  %2226 = vmatpush1.msra.mxu0 %v1697
  %2227 = vmatprep.subr.mxu0 0.0
  %2228 = vmatpush1.msra.mxu0 %v1698
  %2229 = vmatprep.subr.mxu0 0.0
  %2230 = vmatpush1.msra.mxu0 %v1699
  %2231 = vmatprep.subr.mxu0 0.0
  %2232 = vmatpush1.msra.mxu0 0.0
  %2233 = vmatprep.subr.mxu0 0.0
  %2234 = vmatpush1.msra.mxu0 0.0
  %2235 = vmatprep.subr.mxu0 0.0
  %2236 = vmatpush1.msra.mxu0 0.0
  %2237 = vmatprep.subr.mxu0 0.0
  %2238 = vmatpush1.msra.mxu0 0.0
  %2239 = vmatprep.subr.mxu0 0.0
  %2240 = vmatpush1.msra.mxu0 0.0
  %2241 = vmatprep.subr.mxu0 0.0
  %2242 = vmatpush1.msra.mxu0 0.0
  %2243 = vmatprep.subr.mxu0 0.0
  %2244 = vmatpush1.msra.mxu0 0.0
  %2245 = vmatprep.subr.mxu0 0.0
  %2246 = vmatpush1.msra.mxu0 0.0
  %2247 = vmatprep.subr.mxu0 0.0
  %2248 = vmatpush1.msra.mxu0 0.0
  %2249 = vmatprep.subr.mxu0 0.0
  %2250 = vmatpush1.msra.mxu0 0.0
  %2251 = vmatprep.subr.mxu0 0.0
  %2252 = vmatpush1.msra.mxu0 0.0
  %2253 = vmatprep.subr.mxu0 0.0
  %2254 = vmatpush1.msra.mxu0 0.0
  %2255 = vmatprep.subr.mxu0 0.0
  %2256 = vmatpush1.msra.mxu0 0.0
  %2257 = vmatprep.subr.mxu0 0.0
  %2258 = vmatpush1.msra.mxu0 0.0
  %2259 = vmatprep.subr.mxu0 0.0
  %2260 = vmatpush1.msra.mxu0 0.0
  %2261 = vmatprep.subr.mxu0 0.0
  %2262 = vmatpush1.msra.mxu0 0.0
  %2263 = vmatprep.subr.mxu0 0.0
  %2264 = vmatpush1.msra.mxu0 0.0
  %2265 = vmatprep.subr.mxu0 0.0
  %2266 = vmatpush1.msra.mxu0 0.0
  %2267 = vmatprep.subr.mxu0 0.0
  %2268 = vmatpush1.msra.mxu0 0.0
  %2269 = vmatprep.subr.mxu0 0.0
  %2270 = vmatpush1.msra.mxu0 0.0
  %2271 = vmatprep.subr.mxu0 0.0
  %2272 = vmatpush1.msra.mxu0 0.0
  %2273 = vmatprep.subr.mxu0 0.0
  %2274 = vmatpush1.msra.mxu0 0.0
  %2275 = vmatprep.subr.mxu0 0.0
  %2276 = vmatpush1.msra.mxu0 0.0
  %2277 = vmatprep.subr.mxu0 0.0
  %2278 = vmatpush1.msra.mxu0 0.0
  %2279 = vmatprep.subr.mxu0 0.0
  %2280 = vmatpush1.msra.mxu0 0.0
  %2281 = vmatprep.subr.mxu0 0.0
  %2282 = vmatpush1.msra.mxu0 0.0
  %2283 = vmatprep.subr.mxu0 0.0
  %2284 = vmatpush1.msra.mxu0 0.0
  %2285 = vmatprep.subr.mxu0 0.0
  %2286 = vmatpush1.msra.mxu0 0.0
  %2287 = vmatprep.mubr.f32.mxu0 0.0
  %2288 = vmatmul.mubr.f32.gmra.mrb[0].mxu0 %v2128
  %v2289 = vpop.f32.mrb[0].mxu0
  %v2290 = vadd.f32 %v2126, %v2289
  %v2291 = vpop.f32.mrb[0].mxu0
  %2292 = vmatprep.mubr.f32.mxu0 0.0
  %2293 = vmatmul.mubr.f32.gmra.mrb[0].mxu0 %v2131
  %v2294 = vpop.f32.mrb[0].mxu0
  %v2295 = vadd.f32 %v2126, %v2294
  %v2296 = vpop.f32.mrb[0].mxu0
  %2297 = vmatprep.mubr.f32.mxu0 0.0
  %2298 = vmatmul.mubr.f32.gmra.mrb[0].mxu0 %v2134
  %v2299 = vpop.f32.mrb[0].mxu0
  %v2300 = vadd.f32 %v2126, %v2299
  %v2301 = vpop.f32.mrb[0].mxu0
  %2302 = vmatprep.mubr.f32.mxu0 0.0
  %2303 = vmatmul.mubr.f32.gmra.mrb[0].mxu0 %v2137
  %v2304 = vpop.f32.mrb[0].mxu0
  %v2305 = vadd.f32 %v2126, %v2304
  %v2306 = vpop.f32.mrb[0].mxu0
  %2307 = vmatprep.mubr.f32.mxu0 0.0
  %2308 = vmatmul.mubr.f32.gmra.mrb[0].mxu0 %v2140
  %v2309 = vpop.f32.mrb[0].mxu0
  %v2310 = vadd.f32 %v2126, %v2309
  %v2311 = vpop.f32.mrb[0].mxu0
  %2312 = vmatprep.mubr.f32.mxu0 0.0
  %2313 = vmatmul.mubr.f32.gmra.mrb[0].mxu0 %v2143
  %v2314 = vpop.f32.mrb[0].mxu0
  %v2315 = vadd.f32 %v2126, %v2314
  %v2316 = vpop.f32.mrb[0].mxu0
  %2317 = vmatprep.mubr.f32.mxu0 0.0
  %2318 = vmatmul.mubr.f32.gmra.mrb[0].mxu0 %v2146
  %v2319 = vpop.f32.mrb[0].mxu0
  %v2320 = vadd.f32 %v2126, %v2319
  %v2321 = vpop.f32.mrb[0].mxu0
  %2322 = vmatprep.mubr.f32.mxu0 0.0
  %2323 = vmatmul.mubr.f32.gmra.mrb[0].mxu0 %v2149
  %v2324 = vpop.f32.mrb[0].mxu0
  %v2325 = vadd.f32 %v2126, %v2324
  %v2326 = vpop.f32.mrb[0].mxu0
  %2327 = vmatprep.mubr.f32.mxu0 0.0
  %2328 = vmatmul.mubr.f32.gmra.mrb[0].mxu0 %v2152
  %v2329 = vpop.f32.mrb[0].mxu0
  %v2330 = vadd.f32 %v2126, %v2329
  %v2331 = vpop.f32.mrb[0].mxu0
  %2332 = vmatprep.mubr.f32.mxu0 0.0
  %2333 = vmatmul.mubr.f32.gmra.mrb[0].mxu0 %v2155
  %v2334 = vpop.f32.mrb[0].mxu0
  %v2335 = vadd.f32 %v2126, %v2334
  %v2336 = vpop.f32.mrb[0].mxu0
  %2337 = vmatprep.mubr.f32.mxu0 0.0
  %2338 = vmatmul.mubr.f32.gmra.mrb[0].mxu0 %v2158
  %v2339 = vpop.f32.mrb[0].mxu0
  %v2340 = vadd.f32 %v2126, %v2339
  %v2341 = vpop.f32.mrb[0].mxu0
  %2342 = vmatprep.mubr.f32.mxu0 0.0
  %2343 = vmatmul.mubr.f32.gmra.mrb[0].mxu0 %v2161
  %v2344 = vpop.f32.mrb[0].mxu0
  %v2345 = vadd.f32 %v2126, %v2344
  %v2346 = vpop.f32.mrb[0].mxu0
  %2347 = vmatprep.mubr.f32.mxu0 0.0
  %2348 = vmatmul.mubr.f32.gmra.mrb[0].mxu0 %v2164
  %v2349 = vpop.f32.mrb[0].mxu0
  %v2350 = vadd.f32 %v2126, %v2349
  %v2351 = vpop.f32.mrb[0].mxu0
  %2352 = vmatprep.mubr.f32.mxu0 0.0
  %2353 = vmatmul.mubr.f32.gmra.mrb[0].mxu0 %v2167
  %v2354 = vpop.f32.mrb[0].mxu0
  %v2355 = vadd.f32 %v2126, %v2354
  %v2356 = vpop.f32.mrb[0].mxu0
  %2357 = vmatprep.mubr.f32.mxu0 0.0
  %2358 = vmatmul.mubr.f32.gmra.mrb[0].mxu0 %v2170
  %v2359 = vpop.f32.mrb[0].mxu0
  %v2360 = vadd.f32 %v2126, %v2359
  %v2361 = vpop.f32.mrb[0].mxu0
  %2362 = vmatprep.mubr.f32.mxu0 0.0
  %2363 = vmatmul.mubr.f32.gmra.mrb[0].mxu0 %v2173
  %v2364 = vpop.f32.mrb[0].mxu0
  %v2365 = vadd.f32 %v2126, %v2364
  %v2366 = vpop.f32.mrb[0].mxu0
  %2367 = vmatprep.mubr.f32.mxu0 0.0
  %2368 = vmatmul.mubr.f32.gmra.mrb[0].mxu0 %v2176
  %v2369 = vpop.f32.mrb[0].mxu0
  %v2370 = vadd.f32 %v2126, %v2369
  %v2371 = vpop.f32.mrb[0].mxu0
  %2372 = vmatprep.mubr.f32.mxu0 0.0
  %2373 = vmatmul.mubr.f32.gmra.mrb[0].mxu0 %v2179
  %v2374 = vpop.f32.mrb[0].mxu0
  %v2375 = vadd.f32 %v2126, %v2374
  %v2376 = vpop.f32.mrb[0].mxu0
  %2377 = vmatprep.mubr.f32.mxu0 0.0
  %2378 = vmatmul.mubr.f32.gmra.mrb[0].mxu0 %v2182
  %v2379 = vpop.f32.mrb[0].mxu0
  %v2380 = vadd.f32 %v2126, %v2379
  %v2381 = vpop.f32.mrb[0].mxu0
  %2382 = vmatprep.mubr.f32.mxu0 0.0
  %2383 = vmatmul.mubr.f32.gmra.mrb[0].mxu0 %v2185
  %v2384 = vpop.f32.mrb[0].mxu0
  %v2385 = vadd.f32 %v2126, %v2384
  %v2386 = vpop.f32.mrb[0].mxu0
  %2387 = vmatprep.mubr.f32.mxu0 0.0
  %2388 = vmatmul.mubr.f32.gmra.mrb[0].mxu0 %v2188
  %v2389 = vpop.f32.mrb[0].mxu0
  %v2390 = vadd.f32 %v2126, %v2389
  %v2391 = vpop.f32.mrb[0].mxu0
  %2392 = vmatprep.mubr.f32.mxu0 0.0
  %2393 = vmatmul.mubr.f32.gmra.mrb[0].mxu0 %v2191
  %v2394 = vpop.f32.mrb[0].mxu0
  %v2395 = vadd.f32 %v2126, %v2394
  %v2396 = vpop.f32.mrb[0].mxu0
  %2397 = vmatprep.mubr.f32.mxu0 0.0
  %2398 = vmatmul.mubr.f32.gmra.mrb[0].mxu0 %v2194
  %v2399 = vpop.f32.mrb[0].mxu0
  %v2400 = vadd.f32 %v2126, %v2399
  %v2401 = vpop.f32.mrb[0].mxu0
  %2402 = vmatprep.mubr.f32.mxu0 0.0
  %2403 = vmatmul.mubr.f32.gmra.mrb[0].mxu0 %v2197
  %v2404 = vpop.f32.mrb[0].mxu0
  %v2405 = vadd.f32 %v2126, %v2404
  %v2406 = vpop.f32.mrb[0].mxu0
  %2407 = vmatprep.mubr.f32.mxu0 0.0
  %2408 = vmatmul.mubr.f32.gmra.mrb[0].mxu0 %v2200
  %v2409 = vpop.f32.mrb[0].mxu0
  %v2410 = vadd.f32 %v2126, %v2409
  %v2411 = vpop.f32.mrb[0].mxu0
  %2412 = vmatprep.mubr.f32.mxu0 0.0
  %2413 = vmatmul.mubr.f32.gmra.mrb[0].mxu0 %v2203
  %v2414 = vpop.f32.mrb[0].mxu0
  %v2415 = vadd.f32 %v2126, %v2414
  %v2416 = vpop.f32.mrb[0].mxu0
  %2417 = vmatprep.mubr.f32.mxu0 0.0
  %2418 = vmatmul.mubr.f32.gmra.mrb[0].mxu0 %v2206
  %v2419 = vpop.f32.mrb[0].mxu0
  %v2420 = vadd.f32 %v2126, %v2419
  %v2421 = vpop.f32.mrb[0].mxu0
  %2422 = vmatprep.mubr.f32.mxu0 0.0
  %2423 = vmatmul.mubr.f32.gmra.mrb[0].mxu0 %v2209
  %v2424 = vpop.f32.mrb[0].mxu0
  %v2425 = vadd.f32 %v2126, %v2424
  %v2426 = vpop.f32.mrb[0].mxu0
  %2427 = vmatprep.mubr.f32.mxu0 0.0
  %2428 = vmatmul.mubr.f32.gmra.mrb[0].mxu0 %v2212
  %v2429 = vpop.f32.mrb[0].mxu0
  %v2430 = vadd.f32 %v2126, %v2429
  %v2431 = vpop.f32.mrb[0].mxu0
  %2432 = vmatprep.mubr.f32.mxu0 0.0
  %2433 = vmatmul.mubr.f32.gmra.mrb[0].mxu0 %v2215
  %v2434 = vpop.f32.mrb[0].mxu0
  %v2435 = vadd.f32 %v2126, %v2434
  %v2436 = vpop.f32.mrb[0].mxu0
  %2437 = vmatprep.mubr.f32.mxu0 0.0
  %2438 = vmatmul.mubr.f32.gmra.mrb[0].mxu0 %v2218
  %v2439 = vpop.f32.mrb[0].mxu0
  %v2440 = vadd.f32 %v2126, %v2439
  %v2441 = vpop.f32.mrb[0].mxu0
  %2442 = vmatprep.mubr.f32.mxu0 0.0
  %2443 = vmatmul.mubr.f32.gmra.mrb[0].mxu0 %v2221
  %v2444 = vpop.f32.mrb[0].mxu0
  %v2445 = vadd.f32 %v2126, %v2444
  %v2446 = vpop.f32.mrb[0].mxu0
  %2447 = vdwg.mxu0
  %v2448 = vadd.f32 %v808, %v2290
  %v2449 = vadd.f32 %v809, %v2295
  %v2450 = vadd.f32 %v810, %v2300
  %v2451 = vadd.f32 %v811, %v2305
  %v2452 = vadd.f32 %v812, %v2310
  %v2453 = vadd.f32 %v813, %v2315
  %v2454 = vadd.f32 %v814, %v2320
  %v2455 = vadd.f32 %v815, %v2325
  %v2456 = vadd.f32 %v816, %v2330
  %v2457 = vadd.f32 %v817, %v2335
  %v2458 = vadd.f32 %v818, %v2340
  %v2459 = vadd.f32 %v819, %v2345
  %v2460 = vadd.f32 %v820, %v2350
  %v2461 = vadd.f32 %v821, %v2355
  %v2462 = vadd.f32 %v822, %v2360
  %v2463 = vadd.f32 %v823, %v2365
  %v2464 = vadd.f32 %v824, %v2370
  %v2465 = vadd.f32 %v825, %v2375
  %v2466 = vadd.f32 %v826, %v2380
  %v2467 = vadd.f32 %v827, %v2385
  %v2468 = vadd.f32 %v828, %v2390
  %v2469 = vadd.f32 %v829, %v2395
  %v2470 = vadd.f32 %v830, %v2400
  %v2471 = vadd.f32 %v831, %v2405
  %v2472 = vadd.f32 %v832, %v2410
  %v2473 = vadd.f32 %v833, %v2415
  %v2474 = vadd.f32 %v834, %v2420
  %v2475 = vadd.f32 %v835, %v2425
  %v2476 = vadd.f32 %v836, %v2430
  %v2477 = vadd.f32 %v837, %v2435
  %v2478 = vadd.f32 %v838, %v2440
  %v2479 = vadd.f32 %v839, %v2445
  %s2480 = scalar_lea.vmem %s1, 48
  %v2481 = vld [vmem:[%s2480] sm:$0xff]
  %v2482 = vld [vmem:[%s2480 + $0x8] sm:$0xff]
  %s2483 = scalar_lea.vmem %s3, 96
  %v2484 = vld [vmem:[%s2483] sm:$0xff]
  %v2485 = vld [vmem:[%s2483 + $0x8] sm:$0xff]
  %v2486 = vld [vmem:[%s2483 + $0x10] sm:$0xff]
  %v2487 = vld [vmem:[%s2483 + $0x18] sm:$0xff]
  %v2488 = vld [vmem:[%s2 + $0x3] sm:$0x1]
  %v2489 = vld [vmem:[%s4 + $0x3] sm:$0x1]
  %v2490 = vlaneseq
  %v2491 = vshrl.u32 %v2490, 7
  %v2492 = vsub.s32 0, %v2491
  %v2493 = vrot.slane %v2488, %v2492
  %v2495 = vsel %vm160, %v2448, 0
  %v2498 = vsel %vm160, %v2449, 0
  %v2501 = vsel %vm160, %v2450, 0
  %v2504 = vsel %vm160, %v2451, 0
  %v2507 = vsel %vm160, %v2452, 0
  %v2510 = vsel %vm160, %v2453, 0
  %v2513 = vsel %vm160, %v2454, 0
  %v2516 = vsel %vm160, %v2455, 0
  %v2519 = vsel %vm160, %v2456, 0
  %v2522 = vsel %vm160, %v2457, 0
  %v2525 = vsel %vm160, %v2458, 0
  %v2528 = vsel %vm160, %v2459, 0
  %v2531 = vsel %vm160, %v2460, 0
  %v2534 = vsel %vm160, %v2461, 0
  %v2537 = vsel %vm160, %v2462, 0
  %v2540 = vsel %vm160, %v2463, 0
  %v2543 = vsel %vm160, %v2464, 0
  %v2546 = vsel %vm160, %v2465, 0
  %v2549 = vsel %vm160, %v2466, 0
  %v2552 = vsel %vm160, %v2467, 0
  %v2555 = vsel %vm160, %v2468, 0
  %v2558 = vsel %vm160, %v2469, 0
  %v2561 = vsel %vm160, %v2470, 0
  %v2564 = vsel %vm160, %v2471, 0
  %v2567 = vsel %vm160, %v2472, 0
  %v2570 = vsel %vm160, %v2473, 0
  %v2573 = vsel %vm160, %v2474, 0
  %v2576 = vsel %vm160, %v2475, 0
  %v2579 = vsel %vm160, %v2476, 0
  %v2582 = vsel %vm160, %v2477, 0
  %v2585 = vsel %vm160, %v2478, 0
  %v2588 = vsel %vm160, %v2479, 0
  %2590 = vmatprep.subr.mxu0 0.0
  %2591 = vmatpush1.msra.mxu0 %v2481
  %2592 = vmatprep.subr.mxu0 0.0
  %2593 = vmatpush1.msra.mxu0 %v2482
  %2594 = vmatprep.subr.mxu0 0.0
  %2595 = vmatpush1.msra.mxu0 0.0
  %2596 = vmatprep.subr.mxu0 0.0
  %2597 = vmatpush1.msra.mxu0 0.0
  %2598 = vmatprep.subr.mxu0 0.0
  %2599 = vmatpush1.msra.mxu0 0.0
  %2600 = vmatprep.subr.mxu0 0.0
  %2601 = vmatpush1.msra.mxu0 0.0
  %2602 = vmatprep.subr.mxu0 0.0
  %2603 = vmatpush1.msra.mxu0 0.0
  %2604 = vmatprep.subr.mxu0 0.0
  %2605 = vmatpush1.msra.mxu0 0.0
  %2606 = vmatprep.subr.mxu0 0.0
  %2607 = vmatpush1.msra.mxu0 0.0
  %2608 = vmatprep.subr.mxu0 0.0
  %2609 = vmatpush1.msra.mxu0 0.0
  %2610 = vmatprep.subr.mxu0 0.0
  %2611 = vmatpush1.msra.mxu0 0.0
  %2612 = vmatprep.subr.mxu0 0.0
  %2613 = vmatpush1.msra.mxu0 0.0
  %2614 = vmatprep.subr.mxu0 0.0
  %2615 = vmatpush1.msra.mxu0 0.0
  %2616 = vmatprep.subr.mxu0 0.0
  %2617 = vmatpush1.msra.mxu0 0.0
  %2618 = vmatprep.subr.mxu0 0.0
  %2619 = vmatpush1.msra.mxu0 0.0
  %2620 = vmatprep.subr.mxu0 0.0
  %2621 = vmatpush1.msra.mxu0 0.0
  %2622 = vmatprep.subr.mxu0 0.0
  %2623 = vmatpush1.msra.mxu0 0.0
  %2624 = vmatprep.subr.mxu0 0.0
  %2625 = vmatpush1.msra.mxu0 0.0
  %2626 = vmatprep.subr.mxu0 0.0
  %2627 = vmatpush1.msra.mxu0 0.0
  %2628 = vmatprep.subr.mxu0 0.0
  %2629 = vmatpush1.msra.mxu0 0.0
  %2630 = vmatprep.subr.mxu0 0.0
  %2631 = vmatpush1.msra.mxu0 0.0
  %2632 = vmatprep.subr.mxu0 0.0
  %2633 = vmatpush1.msra.mxu0 0.0
  %2634 = vmatprep.subr.mxu0 0.0
  %2635 = vmatpush1.msra.mxu0 0.0
  %2636 = vmatprep.subr.mxu0 0.0
  %2637 = vmatpush1.msra.mxu0 0.0
  %2638 = vmatprep.subr.mxu0 0.0
  %2639 = vmatpush1.msra.mxu0 0.0
  %2640 = vmatprep.subr.mxu0 0.0
  %2641 = vmatpush1.msra.mxu0 0.0
  %2642 = vmatprep.subr.mxu0 0.0
  %2643 = vmatpush1.msra.mxu0 0.0
  %2644 = vmatprep.subr.mxu0 0.0
  %2645 = vmatpush1.msra.mxu0 0.0
  %2646 = vmatprep.subr.mxu0 0.0
  %2647 = vmatpush1.msra.mxu0 0.0
  %2648 = vmatprep.subr.mxu0 0.0
  %2649 = vmatpush1.msra.mxu0 0.0
  %2650 = vmatprep.subr.mxu0 0.0
  %2651 = vmatpush1.msra.mxu0 0.0
  %2652 = vmatprep.subr.mxu0 0.0
  %2653 = vmatpush1.msra.mxu0 0.0
  %2654 = vmatprep.mubr.f32.mxu0 0.0
  %2655 = vmatmul.mubr.f32.gmra.mrb[0].mxu0 %v2495
  %v2656 = vpop.f32.mrb[0].mxu0
  %v2657 = vadd.f32 %v2493, %v2656
  %v2658 = vpop.f32.mrb[0].mxu0
  %2659 = vmatprep.mubr.f32.mxu0 0.0
  %2660 = vmatmul.mubr.f32.gmra.mrb[0].mxu0 %v2498
  %v2661 = vpop.f32.mrb[0].mxu0
  %v2662 = vadd.f32 %v2493, %v2661
  %v2663 = vpop.f32.mrb[0].mxu0
  %2664 = vmatprep.mubr.f32.mxu0 0.0
  %2665 = vmatmul.mubr.f32.gmra.mrb[0].mxu0 %v2501
  %v2666 = vpop.f32.mrb[0].mxu0
  %v2667 = vadd.f32 %v2493, %v2666
  %v2668 = vpop.f32.mrb[0].mxu0
  %2669 = vmatprep.mubr.f32.mxu0 0.0
  %2670 = vmatmul.mubr.f32.gmra.mrb[0].mxu0 %v2504
  %v2671 = vpop.f32.mrb[0].mxu0
  %v2672 = vadd.f32 %v2493, %v2671
  %v2673 = vpop.f32.mrb[0].mxu0
  %2674 = vmatprep.mubr.f32.mxu0 0.0
  %2675 = vmatmul.mubr.f32.gmra.mrb[0].mxu0 %v2507
  %v2676 = vpop.f32.mrb[0].mxu0
  %v2677 = vadd.f32 %v2493, %v2676
  %v2678 = vpop.f32.mrb[0].mxu0
  %2679 = vmatprep.mubr.f32.mxu0 0.0
  %2680 = vmatmul.mubr.f32.gmra.mrb[0].mxu0 %v2510
  %v2681 = vpop.f32.mrb[0].mxu0
  %v2682 = vadd.f32 %v2493, %v2681
  %v2683 = vpop.f32.mrb[0].mxu0
  %2684 = vmatprep.mubr.f32.mxu0 0.0
  %2685 = vmatmul.mubr.f32.gmra.mrb[0].mxu0 %v2513
  %v2686 = vpop.f32.mrb[0].mxu0
  %v2687 = vadd.f32 %v2493, %v2686
  %v2688 = vpop.f32.mrb[0].mxu0
  %2689 = vmatprep.mubr.f32.mxu0 0.0
  %2690 = vmatmul.mubr.f32.gmra.mrb[0].mxu0 %v2516
  %v2691 = vpop.f32.mrb[0].mxu0
  %v2692 = vadd.f32 %v2493, %v2691
  %v2693 = vpop.f32.mrb[0].mxu0
  %2694 = vmatprep.mubr.f32.mxu0 0.0
  %2695 = vmatmul.mubr.f32.gmra.mrb[0].mxu0 %v2519
  %v2696 = vpop.f32.mrb[0].mxu0
  %v2697 = vadd.f32 %v2493, %v2696
  %v2698 = vpop.f32.mrb[0].mxu0
  %2699 = vmatprep.mubr.f32.mxu0 0.0
  %2700 = vmatmul.mubr.f32.gmra.mrb[0].mxu0 %v2522
  %v2701 = vpop.f32.mrb[0].mxu0
  %v2702 = vadd.f32 %v2493, %v2701
  %v2703 = vpop.f32.mrb[0].mxu0
  %2704 = vmatprep.mubr.f32.mxu0 0.0
  %2705 = vmatmul.mubr.f32.gmra.mrb[0].mxu0 %v2525
  %v2706 = vpop.f32.mrb[0].mxu0
  %v2707 = vadd.f32 %v2493, %v2706
  %v2708 = vpop.f32.mrb[0].mxu0
  %2709 = vmatprep.mubr.f32.mxu0 0.0
  %2710 = vmatmul.mubr.f32.gmra.mrb[0].mxu0 %v2528
  %v2711 = vpop.f32.mrb[0].mxu0
  %v2712 = vadd.f32 %v2493, %v2711
  %v2713 = vpop.f32.mrb[0].mxu0
  %2714 = vmatprep.mubr.f32.mxu0 0.0
  %2715 = vmatmul.mubr.f32.gmra.mrb[0].mxu0 %v2531
  %v2716 = vpop.f32.mrb[0].mxu0
  %v2717 = vadd.f32 %v2493, %v2716
  %v2718 = vpop.f32.mrb[0].mxu0
  %2719 = vmatprep.mubr.f32.mxu0 0.0
  %2720 = vmatmul.mubr.f32.gmra.mrb[0].mxu0 %v2534
  %v2721 = vpop.f32.mrb[0].mxu0
  %v2722 = vadd.f32 %v2493, %v2721
  %v2723 = vpop.f32.mrb[0].mxu0
  %2724 = vmatprep.mubr.f32.mxu0 0.0
  %2725 = vmatmul.mubr.f32.gmra.mrb[0].mxu0 %v2537
  %v2726 = vpop.f32.mrb[0].mxu0
  %v2727 = vadd.f32 %v2493, %v2726
  %v2728 = vpop.f32.mrb[0].mxu0
  %2729 = vmatprep.mubr.f32.mxu0 0.0
  %2730 = vmatmul.mubr.f32.gmra.mrb[0].mxu0 %v2540
  %v2731 = vpop.f32.mrb[0].mxu0
  %v2732 = vadd.f32 %v2493, %v2731
  %v2733 = vpop.f32.mrb[0].mxu0
  %2734 = vmatprep.mubr.f32.mxu0 0.0
  %2735 = vmatmul.mubr.f32.gmra.mrb[0].mxu0 %v2543
  %v2736 = vpop.f32.mrb[0].mxu0
  %v2737 = vadd.f32 %v2493, %v2736
  %v2738 = vpop.f32.mrb[0].mxu0
  %2739 = vmatprep.mubr.f32.mxu0 0.0
  %2740 = vmatmul.mubr.f32.gmra.mrb[0].mxu0 %v2546
  %v2741 = vpop.f32.mrb[0].mxu0
  %v2742 = vadd.f32 %v2493, %v2741
  %v2743 = vpop.f32.mrb[0].mxu0
  %2744 = vmatprep.mubr.f32.mxu0 0.0
  %2745 = vmatmul.mubr.f32.gmra.mrb[0].mxu0 %v2549
  %v2746 = vpop.f32.mrb[0].mxu0
  %v2747 = vadd.f32 %v2493, %v2746
  %v2748 = vpop.f32.mrb[0].mxu0
  %2749 = vmatprep.mubr.f32.mxu0 0.0
  %2750 = vmatmul.mubr.f32.gmra.mrb[0].mxu0 %v2552
  %v2751 = vpop.f32.mrb[0].mxu0
  %v2752 = vadd.f32 %v2493, %v2751
  %v2753 = vpop.f32.mrb[0].mxu0
  %2754 = vmatprep.mubr.f32.mxu0 0.0
  %2755 = vmatmul.mubr.f32.gmra.mrb[0].mxu0 %v2555
  %v2756 = vpop.f32.mrb[0].mxu0
  %v2757 = vadd.f32 %v2493, %v2756
  %v2758 = vpop.f32.mrb[0].mxu0
  %2759 = vmatprep.mubr.f32.mxu0 0.0
  %2760 = vmatmul.mubr.f32.gmra.mrb[0].mxu0 %v2558
  %v2761 = vpop.f32.mrb[0].mxu0
  %v2762 = vadd.f32 %v2493, %v2761
  %v2763 = vpop.f32.mrb[0].mxu0
  %2764 = vmatprep.mubr.f32.mxu0 0.0
  %2765 = vmatmul.mubr.f32.gmra.mrb[0].mxu0 %v2561
  %v2766 = vpop.f32.mrb[0].mxu0
  %v2767 = vadd.f32 %v2493, %v2766
  %v2768 = vpop.f32.mrb[0].mxu0
  %2769 = vmatprep.mubr.f32.mxu0 0.0
  %2770 = vmatmul.mubr.f32.gmra.mrb[0].mxu0 %v2564
  %v2771 = vpop.f32.mrb[0].mxu0
  %v2772 = vadd.f32 %v2493, %v2771
  %v2773 = vpop.f32.mrb[0].mxu0
  %2774 = vmatprep.mubr.f32.mxu0 0.0
  %2775 = vmatmul.mubr.f32.gmra.mrb[0].mxu0 %v2567
  %v2776 = vpop.f32.mrb[0].mxu0
  %v2777 = vadd.f32 %v2493, %v2776
  %v2778 = vpop.f32.mrb[0].mxu0
  %2779 = vmatprep.mubr.f32.mxu0 0.0
  %2780 = vmatmul.mubr.f32.gmra.mrb[0].mxu0 %v2570
  %v2781 = vpop.f32.mrb[0].mxu0
  %v2782 = vadd.f32 %v2493, %v2781
  %v2783 = vpop.f32.mrb[0].mxu0
  %2784 = vmatprep.mubr.f32.mxu0 0.0
  %2785 = vmatmul.mubr.f32.gmra.mrb[0].mxu0 %v2573
  %v2786 = vpop.f32.mrb[0].mxu0
  %v2787 = vadd.f32 %v2493, %v2786
  %v2788 = vpop.f32.mrb[0].mxu0
  %2789 = vmatprep.mubr.f32.mxu0 0.0
  %2790 = vmatmul.mubr.f32.gmra.mrb[0].mxu0 %v2576
  %v2791 = vpop.f32.mrb[0].mxu0
  %v2792 = vadd.f32 %v2493, %v2791
  %v2793 = vpop.f32.mrb[0].mxu0
  %2794 = vmatprep.mubr.f32.mxu0 0.0
  %2795 = vmatmul.mubr.f32.gmra.mrb[0].mxu0 %v2579
  %v2796 = vpop.f32.mrb[0].mxu0
  %v2797 = vadd.f32 %v2493, %v2796
  %v2798 = vpop.f32.mrb[0].mxu0
  %2799 = vmatprep.mubr.f32.mxu0 0.0
  %2800 = vmatmul.mubr.f32.gmra.mrb[0].mxu0 %v2582
  %v2801 = vpop.f32.mrb[0].mxu0
  %v2802 = vadd.f32 %v2493, %v2801
  %v2803 = vpop.f32.mrb[0].mxu0
  %2804 = vmatprep.mubr.f32.mxu0 0.0
  %2805 = vmatmul.mubr.f32.gmra.mrb[0].mxu0 %v2585
  %v2806 = vpop.f32.mrb[0].mxu0
  %v2807 = vadd.f32 %v2493, %v2806
  %v2808 = vpop.f32.mrb[0].mxu0
  %2809 = vmatprep.mubr.f32.mxu0 0.0
  %2810 = vmatmul.mubr.f32.gmra.mrb[0].mxu0 %v2588
  %v2811 = vpop.f32.mrb[0].mxu0
  %v2812 = vadd.f32 %v2493, %v2811
  %v2813 = vpop.f32.mrb[0].mxu0
  %2814 = vdwg.mxu0
  %v2815 = vtanh.pop %v2657
  %v2816 = vtanh.pop %v2662
  %v2817 = vtanh.pop %v2667
  %v2818 = vtanh.pop %v2672
  %v2819 = vtanh.pop %v2677
  %v2820 = vtanh.pop %v2682
  %v2821 = vtanh.pop %v2687
  %v2822 = vtanh.pop %v2692
  %v2823 = vtanh.pop %v2697
  %v2824 = vtanh.pop %v2702
  %v2825 = vtanh.pop %v2707
  %v2826 = vtanh.pop %v2712
  %v2827 = vtanh.pop %v2717
  %v2828 = vtanh.pop %v2722
  %v2829 = vtanh.pop %v2727
  %v2830 = vtanh.pop %v2732
  %v2831 = vtanh.pop %v2737
  %v2832 = vtanh.pop %v2742
  %v2833 = vtanh.pop %v2747
  %v2834 = vtanh.pop %v2752
  %v2835 = vtanh.pop %v2757
  %v2836 = vtanh.pop %v2762
  %v2837 = vtanh.pop %v2767
  %v2838 = vtanh.pop %v2772
  %v2839 = vtanh.pop %v2777
  %v2840 = vtanh.pop %v2782
  %v2841 = vtanh.pop %v2787
  %v2842 = vtanh.pop %v2792
  %v2843 = vtanh.pop %v2797
  %v2844 = vtanh.pop %v2802
  %v2845 = vtanh.pop %v2807
  %v2846 = vtanh.pop %v2812
  %v2847 = vlaneseq
  %v2848 = vshrl.u32 %v2847, 7
  %v2849 = vsub.s32 0, %v2848
  %v2850 = vrot.slane %v2489, %v2849
  %v2852 = vsel %vm486, %v2815, 0
  %v2855 = vsel %vm486, %v2816, 0
  %v2858 = vsel %vm486, %v2817, 0
  %v2861 = vsel %vm486, %v2818, 0
  %v2864 = vsel %vm486, %v2819, 0
  %v2867 = vsel %vm486, %v2820, 0
  %v2870 = vsel %vm486, %v2821, 0
  %v2873 = vsel %vm486, %v2822, 0
  %v2876 = vsel %vm486, %v2823, 0
  %v2879 = vsel %vm486, %v2824, 0
  %v2882 = vsel %vm486, %v2825, 0
  %v2885 = vsel %vm486, %v2826, 0
  %v2888 = vsel %vm486, %v2827, 0
  %v2891 = vsel %vm486, %v2828, 0
  %v2894 = vsel %vm486, %v2829, 0
  %v2897 = vsel %vm486, %v2830, 0
  %v2900 = vsel %vm486, %v2831, 0
  %v2903 = vsel %vm486, %v2832, 0
  %v2906 = vsel %vm486, %v2833, 0
  %v2909 = vsel %vm486, %v2834, 0
  %v2912 = vsel %vm486, %v2835, 0
  %v2915 = vsel %vm486, %v2836, 0
  %v2918 = vsel %vm486, %v2837, 0
  %v2921 = vsel %vm486, %v2838, 0
  %v2924 = vsel %vm486, %v2839, 0
  %v2927 = vsel %vm486, %v2840, 0
  %v2930 = vsel %vm486, %v2841, 0
  %v2933 = vsel %vm486, %v2842, 0
  %v2936 = vsel %vm486, %v2843, 0
  %v2939 = vsel %vm486, %v2844, 0
  %v2942 = vsel %vm486, %v2845, 0
  %v2945 = vsel %vm486, %v2846, 0
  %2947 = vmatprep.subr.mxu0 0.0
  %2948 = vmatpush1.msra.mxu0 %v2484
  %2949 = vmatprep.subr.mxu0 0.0
  %2950 = vmatpush1.msra.mxu0 %v2485
  %2951 = vmatprep.subr.mxu0 0.0
  %2952 = vmatpush1.msra.mxu0 %v2486
  %2953 = vmatprep.subr.mxu0 0.0
  %2954 = vmatpush1.msra.mxu0 %v2487
  %2955 = vmatprep.subr.mxu0 0.0
  %2956 = vmatpush1.msra.mxu0 0.0
  %2957 = vmatprep.subr.mxu0 0.0
  %2958 = vmatpush1.msra.mxu0 0.0
  %2959 = vmatprep.subr.mxu0 0.0
  %2960 = vmatpush1.msra.mxu0 0.0
  %2961 = vmatprep.subr.mxu0 0.0
  %2962 = vmatpush1.msra.mxu0 0.0
  %2963 = vmatprep.subr.mxu0 0.0
  %2964 = vmatpush1.msra.mxu0 0.0
  %2965 = vmatprep.subr.mxu0 0.0
  %2966 = vmatpush1.msra.mxu0 0.0
  %2967 = vmatprep.subr.mxu0 0.0
  %2968 = vmatpush1.msra.mxu0 0.0
  %2969 = vmatprep.subr.mxu0 0.0
  %2970 = vmatpush1.msra.mxu0 0.0
  %2971 = vmatprep.subr.mxu0 0.0
  %2972 = vmatpush1.msra.mxu0 0.0
  %2973 = vmatprep.subr.mxu0 0.0
  %2974 = vmatpush1.msra.mxu0 0.0
  %2975 = vmatprep.subr.mxu0 0.0
  %2976 = vmatpush1.msra.mxu0 0.0
  %2977 = vmatprep.subr.mxu0 0.0
  %2978 = vmatpush1.msra.mxu0 0.0
  %2979 = vmatprep.subr.mxu0 0.0
  %2980 = vmatpush1.msra.mxu0 0.0
  %2981 = vmatprep.subr.mxu0 0.0
  %2982 = vmatpush1.msra.mxu0 0.0
  %2983 = vmatprep.subr.mxu0 0.0
  %2984 = vmatpush1.msra.mxu0 0.0
  %2985 = vmatprep.subr.mxu0 0.0
  %2986 = vmatpush1.msra.mxu0 0.0
  %2987 = vmatprep.subr.mxu0 0.0
  %2988 = vmatpush1.msra.mxu0 0.0
  %2989 = vmatprep.subr.mxu0 0.0
  %2990 = vmatpush1.msra.mxu0 0.0
  %2991 = vmatprep.subr.mxu0 0.0
  %2992 = vmatpush1.msra.mxu0 0.0
  %2993 = vmatprep.subr.mxu0 0.0
  %2994 = vmatpush1.msra.mxu0 0.0
  %2995 = vmatprep.subr.mxu0 0.0
  %2996 = vmatpush1.msra.mxu0 0.0
  %2997 = vmatprep.subr.mxu0 0.0
  %2998 = vmatpush1.msra.mxu0 0.0
  %2999 = vmatprep.subr.mxu0 0.0
  %3000 = vmatpush1.msra.mxu0 0.0
  %3001 = vmatprep.subr.mxu0 0.0
  %3002 = vmatpush1.msra.mxu0 0.0
  %3003 = vmatprep.subr.mxu0 0.0
  %3004 = vmatpush1.msra.mxu0 0.0
  %3005 = vmatprep.subr.mxu0 0.0
  %3006 = vmatpush1.msra.mxu0 0.0
  %3007 = vmatprep.subr.mxu0 0.0
  %3008 = vmatpush1.msra.mxu0 0.0
  %3009 = vmatprep.subr.mxu0 0.0
  %3010 = vmatpush1.msra.mxu0 0.0
  %3011 = vmatprep.mubr.f32.mxu0 0.0
  %3012 = vmatmul.mubr.f32.gmra.mrb[0].mxu0 %v2852
  %v3013 = vpop.f32.mrb[0].mxu0
  %v3014 = vadd.f32 %v2850, %v3013
  %v3015 = vpop.f32.mrb[0].mxu0
  %3016 = vmatprep.mubr.f32.mxu0 0.0
  %3017 = vmatmul.mubr.f32.gmra.mrb[0].mxu0 %v2855
  %v3018 = vpop.f32.mrb[0].mxu0
  %v3019 = vadd.f32 %v2850, %v3018
  %v3020 = vpop.f32.mrb[0].mxu0
  %3021 = vmatprep.mubr.f32.mxu0 0.0
  %3022 = vmatmul.mubr.f32.gmra.mrb[0].mxu0 %v2858
  %v3023 = vpop.f32.mrb[0].mxu0
  %v3024 = vadd.f32 %v2850, %v3023
  %v3025 = vpop.f32.mrb[0].mxu0
  %3026 = vmatprep.mubr.f32.mxu0 0.0
  %3027 = vmatmul.mubr.f32.gmra.mrb[0].mxu0 %v2861
  %v3028 = vpop.f32.mrb[0].mxu0
  %v3029 = vadd.f32 %v2850, %v3028
  %v3030 = vpop.f32.mrb[0].mxu0
  %3031 = vmatprep.mubr.f32.mxu0 0.0
  %3032 = vmatmul.mubr.f32.gmra.mrb[0].mxu0 %v2864
  %v3033 = vpop.f32.mrb[0].mxu0
  %v3034 = vadd.f32 %v2850, %v3033
  %v3035 = vpop.f32.mrb[0].mxu0
  %3036 = vmatprep.mubr.f32.mxu0 0.0
  %3037 = vmatmul.mubr.f32.gmra.mrb[0].mxu0 %v2867
  %v3038 = vpop.f32.mrb[0].mxu0
  %v3039 = vadd.f32 %v2850, %v3038
  %v3040 = vpop.f32.mrb[0].mxu0
  %3041 = vmatprep.mubr.f32.mxu0 0.0
  %3042 = vmatmul.mubr.f32.gmra.mrb[0].mxu0 %v2870
  %v3043 = vpop.f32.mrb[0].mxu0
  %v3044 = vadd.f32 %v2850, %v3043
  %v3045 = vpop.f32.mrb[0].mxu0
  %3046 = vmatprep.mubr.f32.mxu0 0.0
  %3047 = vmatmul.mubr.f32.gmra.mrb[0].mxu0 %v2873
  %v3048 = vpop.f32.mrb[0].mxu0
  %v3049 = vadd.f32 %v2850, %v3048
  %v3050 = vpop.f32.mrb[0].mxu0
  %3051 = vmatprep.mubr.f32.mxu0 0.0
  %3052 = vmatmul.mubr.f32.gmra.mrb[0].mxu0 %v2876
  %v3053 = vpop.f32.mrb[0].mxu0
  %v3054 = vadd.f32 %v2850, %v3053
  %v3055 = vpop.f32.mrb[0].mxu0
  %3056 = vmatprep.mubr.f32.mxu0 0.0
  %3057 = vmatmul.mubr.f32.gmra.mrb[0].mxu0 %v2879
  %v3058 = vpop.f32.mrb[0].mxu0
  %v3059 = vadd.f32 %v2850, %v3058
  %v3060 = vpop.f32.mrb[0].mxu0
  %3061 = vmatprep.mubr.f32.mxu0 0.0
  %3062 = vmatmul.mubr.f32.gmra.mrb[0].mxu0 %v2882
  %v3063 = vpop.f32.mrb[0].mxu0
  %v3064 = vadd.f32 %v2850, %v3063
  %v3065 = vpop.f32.mrb[0].mxu0
  %3066 = vmatprep.mubr.f32.mxu0 0.0
  %3067 = vmatmul.mubr.f32.gmra.mrb[0].mxu0 %v2885
  %v3068 = vpop.f32.mrb[0].mxu0
  %v3069 = vadd.f32 %v2850, %v3068
  %v3070 = vpop.f32.mrb[0].mxu0
  %3071 = vmatprep.mubr.f32.mxu0 0.0
  %3072 = vmatmul.mubr.f32.gmra.mrb[0].mxu0 %v2888
  %v3073 = vpop.f32.mrb[0].mxu0
  %v3074 = vadd.f32 %v2850, %v3073
  %v3075 = vpop.f32.mrb[0].mxu0
  %3076 = vmatprep.mubr.f32.mxu0 0.0
  %3077 = vmatmul.mubr.f32.gmra.mrb[0].mxu0 %v2891
  %v3078 = vpop.f32.mrb[0].mxu0
  %v3079 = vadd.f32 %v2850, %v3078
  %v3080 = vpop.f32.mrb[0].mxu0
  %3081 = vmatprep.mubr.f32.mxu0 0.0
  %3082 = vmatmul.mubr.f32.gmra.mrb[0].mxu0 %v2894
  %v3083 = vpop.f32.mrb[0].mxu0
  %v3084 = vadd.f32 %v2850, %v3083
  %v3085 = vpop.f32.mrb[0].mxu0
  %3086 = vmatprep.mubr.f32.mxu0 0.0
  %3087 = vmatmul.mubr.f32.gmra.mrb[0].mxu0 %v2897
  %v3088 = vpop.f32.mrb[0].mxu0
  %v3089 = vadd.f32 %v2850, %v3088
  %v3090 = vpop.f32.mrb[0].mxu0
  %3091 = vmatprep.mubr.f32.mxu0 0.0
  %3092 = vmatmul.mubr.f32.gmra.mrb[0].mxu0 %v2900
  %v3093 = vpop.f32.mrb[0].mxu0
  %v3094 = vadd.f32 %v2850, %v3093
  %v3095 = vpop.f32.mrb[0].mxu0
  %3096 = vmatprep.mubr.f32.mxu0 0.0
  %3097 = vmatmul.mubr.f32.gmra.mrb[0].mxu0 %v2903
  %v3098 = vpop.f32.mrb[0].mxu0
  %v3099 = vadd.f32 %v2850, %v3098
  %v3100 = vpop.f32.mrb[0].mxu0
  %3101 = vmatprep.mubr.f32.mxu0 0.0
  %3102 = vmatmul.mubr.f32.gmra.mrb[0].mxu0 %v2906
  %v3103 = vpop.f32.mrb[0].mxu0
  %v3104 = vadd.f32 %v2850, %v3103
  %v3105 = vpop.f32.mrb[0].mxu0
  %3106 = vmatprep.mubr.f32.mxu0 0.0
  %3107 = vmatmul.mubr.f32.gmra.mrb[0].mxu0 %v2909
  %v3108 = vpop.f32.mrb[0].mxu0
  %v3109 = vadd.f32 %v2850, %v3108
  %v3110 = vpop.f32.mrb[0].mxu0
  %3111 = vmatprep.mubr.f32.mxu0 0.0
  %3112 = vmatmul.mubr.f32.gmra.mrb[0].mxu0 %v2912
  %v3113 = vpop.f32.mrb[0].mxu0
  %v3114 = vadd.f32 %v2850, %v3113
  %v3115 = vpop.f32.mrb[0].mxu0
  %3116 = vmatprep.mubr.f32.mxu0 0.0
  %3117 = vmatmul.mubr.f32.gmra.mrb[0].mxu0 %v2915
  %v3118 = vpop.f32.mrb[0].mxu0
  %v3119 = vadd.f32 %v2850, %v3118
  %v3120 = vpop.f32.mrb[0].mxu0
  %3121 = vmatprep.mubr.f32.mxu0 0.0
  %3122 = vmatmul.mubr.f32.gmra.mrb[0].mxu0 %v2918
  %v3123 = vpop.f32.mrb[0].mxu0
  %v3124 = vadd.f32 %v2850, %v3123
  %v3125 = vpop.f32.mrb[0].mxu0
  %3126 = vmatprep.mubr.f32.mxu0 0.0
  %3127 = vmatmul.mubr.f32.gmra.mrb[0].mxu0 %v2921
  %v3128 = vpop.f32.mrb[0].mxu0
  %v3129 = vadd.f32 %v2850, %v3128
  %v3130 = vpop.f32.mrb[0].mxu0
  %3131 = vmatprep.mubr.f32.mxu0 0.0
  %3132 = vmatmul.mubr.f32.gmra.mrb[0].mxu0 %v2924
  %v3133 = vpop.f32.mrb[0].mxu0
  %v3134 = vadd.f32 %v2850, %v3133
  %v3135 = vpop.f32.mrb[0].mxu0
  %3136 = vmatprep.mubr.f32.mxu0 0.0
  %3137 = vmatmul.mubr.f32.gmra.mrb[0].mxu0 %v2927
  %v3138 = vpop.f32.mrb[0].mxu0
  %v3139 = vadd.f32 %v2850, %v3138
  %v3140 = vpop.f32.mrb[0].mxu0
  %3141 = vmatprep.mubr.f32.mxu0 0.0
  %3142 = vmatmul.mubr.f32.gmra.mrb[0].mxu0 %v2930
  %v3143 = vpop.f32.mrb[0].mxu0
  %v3144 = vadd.f32 %v2850, %v3143
  %v3145 = vpop.f32.mrb[0].mxu0
  %3146 = vmatprep.mubr.f32.mxu0 0.0
  %3147 = vmatmul.mubr.f32.gmra.mrb[0].mxu0 %v2933
  %v3148 = vpop.f32.mrb[0].mxu0
  %v3149 = vadd.f32 %v2850, %v3148
  %v3150 = vpop.f32.mrb[0].mxu0
  %3151 = vmatprep.mubr.f32.mxu0 0.0
  %3152 = vmatmul.mubr.f32.gmra.mrb[0].mxu0 %v2936
  %v3153 = vpop.f32.mrb[0].mxu0
  %v3154 = vadd.f32 %v2850, %v3153
  %v3155 = vpop.f32.mrb[0].mxu0
  %3156 = vmatprep.mubr.f32.mxu0 0.0
  %3157 = vmatmul.mubr.f32.gmra.mrb[0].mxu0 %v2939
  %v3158 = vpop.f32.mrb[0].mxu0
  %v3159 = vadd.f32 %v2850, %v3158
  %v3160 = vpop.f32.mrb[0].mxu0
  %3161 = vmatprep.mubr.f32.mxu0 0.0
  %3162 = vmatmul.mubr.f32.gmra.mrb[0].mxu0 %v2942
  %v3163 = vpop.f32.mrb[0].mxu0
  %v3164 = vadd.f32 %v2850, %v3163
  %v3165 = vpop.f32.mrb[0].mxu0
  %3166 = vmatprep.mubr.f32.mxu0 0.0
  %3167 = vmatmul.mubr.f32.gmra.mrb[0].mxu0 %v2945
  %v3168 = vpop.f32.mrb[0].mxu0
  %v3169 = vadd.f32 %v2850, %v3168
  %v3170 = vpop.f32.mrb[0].mxu0
  %3171 = vdwg.mxu0
  %3204 = vrot.lane.b32.xlu0 %v3014, 16
  %v3205 = vpop.permute.xlu0 %3204
  %3206 = vrot.lane.b32.xlu0 %v3019, 16
  %v3207 = vpop.permute.xlu0 %3206
  %3208 = vrot.lane.b32.xlu0 %v3024, 16
  %v3209 = vpop.permute.xlu0 %3208
  %3210 = vrot.lane.b32.xlu0 %v3029, 16
  %v3211 = vpop.permute.xlu0 %3210
  %3212 = vrot.lane.b32.xlu0 %v3034, 16
  %v3213 = vpop.permute.xlu0 %3212
  %3214 = vrot.lane.b32.xlu0 %v3039, 16
  %v3215 = vpop.permute.xlu0 %3214
  %3216 = vrot.lane.b32.xlu0 %v3044, 16
  %v3217 = vpop.permute.xlu0 %3216
  %3218 = vrot.lane.b32.xlu0 %v3049, 16
  %v3219 = vpop.permute.xlu0 %3218
  %3220 = vrot.lane.b32.xlu0 %v3054, 16
  %v3221 = vpop.permute.xlu0 %3220
  %3222 = vrot.lane.b32.xlu0 %v3059, 16
  %v3223 = vpop.permute.xlu0 %3222
  %3224 = vrot.lane.b32.xlu0 %v3064, 16
  %v3225 = vpop.permute.xlu0 %3224
  %3226 = vrot.lane.b32.xlu0 %v3069, 16
  %v3227 = vpop.permute.xlu0 %3226
  %3228 = vrot.lane.b32.xlu0 %v3074, 16
  %v3229 = vpop.permute.xlu0 %3228
  %3230 = vrot.lane.b32.xlu0 %v3079, 16
  %v3231 = vpop.permute.xlu0 %3230
  %3232 = vrot.lane.b32.xlu0 %v3084, 16
  %v3233 = vpop.permute.xlu0 %3232
  %3234 = vrot.lane.b32.xlu0 %v3089, 16
  %v3235 = vpop.permute.xlu0 %3234
  %3236 = vrot.lane.b32.xlu0 %v3094, 16
  %v3237 = vpop.permute.xlu0 %3236
  %3238 = vrot.lane.b32.xlu0 %v3099, 16
  %v3239 = vpop.permute.xlu0 %3238
  %3240 = vrot.lane.b32.xlu0 %v3104, 16
  %v3241 = vpop.permute.xlu0 %3240
  %3242 = vrot.lane.b32.xlu0 %v3109, 16
  %v3243 = vpop.permute.xlu0 %3242
  %3244 = vrot.lane.b32.xlu0 %v3114, 16
  %v3245 = vpop.permute.xlu0 %3244
  %3246 = vrot.lane.b32.xlu0 %v3119, 16
  %v3247 = vpop.permute.xlu0 %3246
  %3248 = vrot.lane.b32.xlu0 %v3124, 16
  %v3249 = vpop.permute.xlu0 %3248
  %3250 = vrot.lane.b32.xlu0 %v3129, 16
  %v3251 = vpop.permute.xlu0 %3250
  %3252 = vrot.lane.b32.xlu0 %v3134, 16
  %v3253 = vpop.permute.xlu0 %3252
  %3254 = vrot.lane.b32.xlu0 %v3139, 16
  %v3255 = vpop.permute.xlu0 %3254
  %3256 = vrot.lane.b32.xlu0 %v3144, 16
  %v3257 = vpop.permute.xlu0 %3256
  %3258 = vrot.lane.b32.xlu0 %v3149, 16
  %v3259 = vpop.permute.xlu0 %3258
  %3260 = vrot.lane.b32.xlu0 %v3154, 16
  %v3261 = vpop.permute.xlu0 %3260
  %3262 = vrot.lane.b32.xlu0 %v3159, 16
  %v3263 = vpop.permute.xlu0 %3262
  %3264 = vrot.lane.b32.xlu0 %v3164, 16
  %v3265 = vpop.permute.xlu0 %3264
  %3266 = vrot.lane.b32.xlu0 %v3169, 16
  %v3267 = vpop.permute.xlu0 %3266
  %v3300 = vadd.f32 %v1660, %v3205
  %v3301 = vadd.f32 %v1661, %v3207
  %v3302 = vadd.f32 %v1662, %v3209
  %v3303 = vadd.f32 %v1663, %v3211
  %v3304 = vadd.f32 %v1664, %v3213
  %v3305 = vadd.f32 %v1665, %v3215
  %v3306 = vadd.f32 %v1666, %v3217
  %v3307 = vadd.f32 %v1667, %v3219
  %v3308 = vadd.f32 %v1668, %v3221
  %v3309 = vadd.f32 %v1669, %v3223
  %v3310 = vadd.f32 %v1670, %v3225
  %v3311 = vadd.f32 %v1671, %v3227
  %v3312 = vadd.f32 %v1672, %v3229
  %v3313 = vadd.f32 %v1673, %v3231
  %v3314 = vadd.f32 %v1674, %v3233
  %v3315 = vadd.f32 %v1675, %v3235
  %v3316 = vadd.f32 %v1676, %v3237
  %v3317 = vadd.f32 %v1677, %v3239
  %v3318 = vadd.f32 %v1678, %v3241
  %v3319 = vadd.f32 %v1679, %v3243
  %v3320 = vadd.f32 %v1680, %v3245
  %v3321 = vadd.f32 %v1681, %v3247
  %v3322 = vadd.f32 %v1682, %v3249
  %v3323 = vadd.f32 %v1683, %v3251
  %v3324 = vadd.f32 %v1684, %v3253
  %v3325 = vadd.f32 %v1685, %v3255
  %v3326 = vadd.f32 %v1686, %v3257
  %v3327 = vadd.f32 %v1687, %v3259
  %v3328 = vadd.f32 %v1688, %v3261
  %v3329 = vadd.f32 %v1689, %v3263
  %v3330 = vadd.f32 %v1690, %v3265
  %v3331 = vadd.f32 %v1691, %v3267
  %v3332 = vsel %vm160, %v2448, %v3300
  %v3333 = vsel %vm160, %v2449, %v3301
  %v3334 = vsel %vm160, %v2450, %v3302
  %v3335 = vsel %vm160, %v2451, %v3303
  %v3336 = vsel %vm160, %v2452, %v3304
  %v3337 = vsel %vm160, %v2453, %v3305
  %v3338 = vsel %vm160, %v2454, %v3306
  %v3339 = vsel %vm160, %v2455, %v3307
  %v3340 = vsel %vm160, %v2456, %v3308
  %v3341 = vsel %vm160, %v2457, %v3309
  %v3342 = vsel %vm160, %v2458, %v3310
  %v3343 = vsel %vm160, %v2459, %v3311
  %v3344 = vsel %vm160, %v2460, %v3312
  %v3345 = vsel %vm160, %v2461, %v3313
  %v3346 = vsel %vm160, %v2462, %v3314
  %v3347 = vsel %vm160, %v2463, %v3315
  %v3348 = vsel %vm160, %v2464, %v3316
  %v3349 = vsel %vm160, %v2465, %v3317
  %v3350 = vsel %vm160, %v2466, %v3318
  %v3351 = vsel %vm160, %v2467, %v3319
  %v3352 = vsel %vm160, %v2468, %v3320
  %v3353 = vsel %vm160, %v2469, %v3321
  %v3354 = vsel %vm160, %v2470, %v3322
  %v3355 = vsel %vm160, %v2471, %v3323
  %v3356 = vsel %vm160, %v2472, %v3324
  %v3357 = vsel %vm160, %v2473, %v3325
  %v3358 = vsel %vm160, %v2474, %v3326
  %v3359 = vsel %vm160, %v2475, %v3327
  %v3360 = vsel %vm160, %v2476, %v3328
  %v3361 = vsel %vm160, %v2477, %v3329
  %v3362 = vsel %vm160, %v2478, %v3330
  %v3363 = vsel %vm160, %v2479, %v3331
  %3364 = vst.msk [vmem:[%s5] sm:$0xff] %vm486, %v3332
  %3365 = vst.msk [vmem:[%s5 + $0x8] sm:$0xff] %vm486, %v3333
  %3366 = vst.msk [vmem:[%s5 + $0x10] sm:$0xff] %vm486, %v3334
  %3367 = vst.msk [vmem:[%s5 + $0x18] sm:$0xff] %vm486, %v3335
  %3368 = vst.msk [vmem:[%s5 + $0x20] sm:$0xff] %vm486, %v3336
  %3369 = vst.msk [vmem:[%s5 + $0x28] sm:$0xff] %vm486, %v3337
  %3370 = vst.msk [vmem:[%s5 + $0x30] sm:$0xff] %vm486, %v3338
  %3371 = vst.msk [vmem:[%s5 + $0x38] sm:$0xff] %vm486, %v3339
  %3372 = vst.msk [vmem:[%s5 + $0x40] sm:$0xff] %vm486, %v3340
  %3373 = vst.msk [vmem:[%s5 + $0x48] sm:$0xff] %vm486, %v3341
  %3374 = vst.msk [vmem:[%s5 + $0x50] sm:$0xff] %vm486, %v3342
  %3375 = vst.msk [vmem:[%s5 + $0x58] sm:$0xff] %vm486, %v3343
  %3376 = vst.msk [vmem:[%s5 + $0x60] sm:$0xff] %vm486, %v3344
  %3377 = vst.msk [vmem:[%s5 + $0x68] sm:$0xff] %vm486, %v3345
  %3378 = vst.msk [vmem:[%s5 + $0x70] sm:$0xff] %vm486, %v3346
  %3379 = vst.msk [vmem:[%s5 + $0x78] sm:$0xff] %vm486, %v3347
  %3380 = vst.msk [vmem:[%s5 + $0x80] sm:$0xff] %vm486, %v3348
  %3381 = vst.msk [vmem:[%s5 + $0x88] sm:$0xff] %vm486, %v3349
  %3382 = vst.msk [vmem:[%s5 + $0x90] sm:$0xff] %vm486, %v3350
  %3383 = vst.msk [vmem:[%s5 + $0x98] sm:$0xff] %vm486, %v3351
  %3384 = vst.msk [vmem:[%s5 + $0xa0] sm:$0xff] %vm486, %v3352
  %3385 = vst.msk [vmem:[%s5 + $0xa8] sm:$0xff] %vm486, %v3353
  %3386 = vst.msk [vmem:[%s5 + $0xb0] sm:$0xff] %vm486, %v3354
  %3387 = vst.msk [vmem:[%s5 + $0xb8] sm:$0xff] %vm486, %v3355
  %3388 = vst.msk [vmem:[%s5 + $0xc0] sm:$0xff] %vm486, %v3356
  %3389 = vst.msk [vmem:[%s5 + $0xc8] sm:$0xff] %vm486, %v3357
  %3390 = vst.msk [vmem:[%s5 + $0xd0] sm:$0xff] %vm486, %v3358
  %3391 = vst.msk [vmem:[%s5 + $0xd8] sm:$0xff] %vm486, %v3359
  %3392 = vst.msk [vmem:[%s5 + $0xe0] sm:$0xff] %vm486, %v3360
  %3393 = vst.msk [vmem:[%s5 + $0xe8] sm:$0xff] %vm486, %v3361
  %3394 = vst.msk [vmem:[%s5 + $0xf0] sm:$0xff] %vm486, %v3362
  %3395 = vst.msk [vmem:[%s5 + $0xf8] sm:$0xff] %vm486, %v3363
  // Predicated region
  $region22: #{tpu_custom_call.1} parent=0 // pred_check
    _
  $region23: #{tpu_custom_call.1} parent=0 // pred_check_branch
    %3397 = sbr.rel (0) target = $region25
  $region24: #{tpu_custom_call.1} parent=0 // pred_region
    _
  $region25: #{tpu_custom_call.1} parent=0 // pred_fallthru
    _
  // Predicated region
  $region26: #{tpu_custom_call.1} parent=0 // pred_check
    _
  $region27: #{tpu_custom_call.1} parent=0 // pred_check_branch
    %3399 = sbr.rel (0) target = $region29
  $region28: #{tpu_custom_call.1} parent=0 // pred_region
    _
  $region29: #{tpu_custom_call.1} parent=0 // pred_fallthru
    _

</llo_original>
